<compile_context>
chip_gen: v7x
topology: tpu7x:2x2x1
jax: 0.10.0
libtpu: 0.0.40
codegen_flags: <defaults>
</compile_context>

<pallas_src>
import functools
import math

import jax
import jax.numpy as jnp
from jax import lax
from jax.experimental import pallas as pl
from jax.experimental.pallas import tpu as pltpu


def _mha_kernel(q_ref, k_ref, v_ref, wq_ref, wk_ref, wv_ref, wo_ref,
                out_ref, attn_ref, *, H, d_k, d_v):
    q = q_ref[...]          # (tq, D)   -- this batch / query tile
    k = k_ref[...]          # (T,  D)   -- full sequence for this batch
    v = v_ref[...]          # (T,  D)

    # Packed-head projections: one MXU matmul each, N = H*d_k lanes.
    # The 1/sqrt(d_k) scale is already folded into wq (done in the wrapper).
    Q = jnp.dot(q, wq_ref[...], preferred_element_type=jnp.float32)   # (tq, H*d_k)
    K = jnp.dot(k, wk_ref[...], preferred_element_type=jnp.float32)   # (T,  H*d_k)
    V = jnp.dot(v, wv_ref[...], preferred_element_type=jnp.float32)   # (T,  H*d_v)

    head_scores = []
    for h in range(H):                                   # static unroll over heads
        Qh = Q[:, h * d_k:(h + 1) * d_k]                 # (tq, d_k)
        Kh = K[:, h * d_k:(h + 1) * d_k]                 # (T,  d_k)
        Vh = V[:, h * d_v:(h + 1) * d_v]                 # (T,  d_v)

        # Contract the last dims of Q and K directly (no explicit transpose).
        e = lax.dot_general(Qh, Kh, (((1,), (1,)), ((), ())),
                            preferred_element_type=jnp.float32)       # (tq, T)

        # Numerically stable softmax; reciprocal goes to the EUP slot.
        m = jnp.max(e, axis=-1, keepdims=True)
        p = jnp.exp(e - m)
        denom = jnp.sum(p, axis=-1, keepdims=True)
        attn = p * pl.reciprocal(denom, approx=True)                  # (tq, T)

        attn_ref[h] = attn.astype(attn_ref.dtype)

        head_scores.append(
            jnp.dot(attn, Vh, preferred_element_type=jnp.float32))    # (tq, d_v)

    # Fused output projection: ONE matmul with contraction depth H*d_v.
    concat = jnp.concatenate(head_scores, axis=-1)                    # (tq, H*d_v)
    out_ref[...] = jnp.dot(concat, wo_ref[...],
                           preferred_element_type=jnp.float32).astype(out_ref.dtype)


def multi_head_attention(q, k, v, W_Q, W_K, W_V, W_O, *, q_tile=256):
    """q, k, v: (B, T, D) (or (T, D)). Returns (output (B,T,D), attn (B,H,T,T))."""
    if q.ndim == 2:
        q, k, v = q[None], k[None], v[None]
    B, T, D = q.shape
    H, _, d_k = W_Q.shape
    d_v = W_V.shape[-1]
    assert W_O.shape == (H * d_v, D)

    # Pack heads into the lane dimension of each projection weight so a single
    # (tq, D) @ (D, H*d_k) matmul computes all heads at once. Fold the
    # 1/sqrt(d_k) softmax scale into W_Q at trace time (tiny one-time weight op).
    scale = 1.0 / math.sqrt(d_k)
    wq_p = (jnp.transpose(W_Q, (1, 0, 2)) * scale).reshape(D, H * d_k)
    wk_p = jnp.transpose(W_K, (1, 0, 2)).reshape(D, H * d_k)
    wv_p = jnp.transpose(W_V, (1, 0, 2)).reshape(D, H * d_v)

    # Query-tile size: full T for short sequences, 256-row tiles otherwise.
    # TODO(synk): re-derive q_tile from a VMEM budget (64 MiB on v7x) for
    # production-sized T/D instead of the fixed 256 default.
    tq = T if T <= q_tile else q_tile
    n_qt = pl.cdiv(T, tq)

    kernel = functools.partial(_mha_kernel, H=H, d_k=d_k, d_v=d_v)

    grid = (B, n_qt)

    in_specs = [
        pl.BlockSpec((None, tq, D), lambda b, i: (b, i, 0)),       # q  (query tile)
        pl.BlockSpec((None, T, D), lambda b, i: (b, 0, 0)),        # k  (full seq)
        pl.BlockSpec((None, T, D), lambda b, i: (b, 0, 0)),        # v  (full seq)
        pl.BlockSpec((D, H * d_k), lambda b, i: (0, 0)),           # packed W_Q (pre-scaled)
        pl.BlockSpec((D, H * d_k), lambda b, i: (0, 0)),           # packed W_K
        pl.BlockSpec((D, H * d_v), lambda b, i: (0, 0)),           # packed W_V
        pl.BlockSpec((H * d_v, D), lambda b, i: (0, 0)),           # W_O
    ]
    out_specs = [
        pl.BlockSpec((None, tq, D), lambda b, i: (b, i, 0)),        # output
        pl.BlockSpec((None, H, tq, T), lambda b, i: (b, 0, i, 0)),  # attention weights
    ]

    out_shape = [
        jax.ShapeDtypeStruct((B, T, D), q.dtype),
        jax.ShapeDtypeStruct((B, H, T, T), q.dtype),
    ]

    return pl.pallas_call(
        kernel,
        out_shape=out_shape,
        grid_spec=pltpu.PrefetchScalarGridSpec(
            num_scalar_prefetch=0,
            grid=grid,
            in_specs=in_specs,
            out_specs=out_specs,
        ),
        compiler_params=pltpu.CompilerParams(
            dimension_semantics=("parallel", "parallel"),
        ),
    )(q, k, v, wq_p, wk_p, wv_p, W_O)


def _reference(q, k, v, W_Q, W_K, W_V, W_O):
    """Pure-JAX replica of the PyTorch forward (for verification)."""
    H, D, d_k = W_Q.shape
    Q = jnp.einsum("btd,hdk->bhtk", q, W_Q)
    K = jnp.einsum("btd,hdk->bhtk", k, W_K)
    V = jnp.einsum("btd,hdk->bhtk", v, W_V)
    energies = jnp.einsum("bhqk,bhsk->bhqs", Q, K) / jnp.sqrt(jnp.float32(d_k))
    attn = jax.nn.softmax(energies, axis=-1)
    scores = jnp.einsum("bhqs,bhsv->bhqv", attn, V)
    B, T = q.shape[0], q.shape[1]
    concat = jnp.transpose(scores, (0, 2, 1, 3)).reshape(B, T, -1)
    out = jnp.matmul(concat, W_O)
    return out, attn


if __name__ == "__main__":
    # Small, module-consistent shapes.
    B, T, D = 2, 8, 32          # batch, seq len, d_model
    H, d_k, d_v = 4, 16, 16     # n_heads, d_k, d_v (d_v == d_k; W_V uses d_k in the module)

    key = jax.random.PRNGKey(0)
    kq, kk, kv, kwq, kwk, kwv, kwo = jax.random.split(key, 7)

    q = jax.random.normal(kq, (B, T, D), dtype=jnp.float32)
    k = jax.random.normal(kk, (B, T, D), dtype=jnp.float32)
    v = jax.random.normal(kv, (B, T, D), dtype=jnp.float32)

    # Deterministic parameter init (synthetic, not a checkpoint load).
    W_Q = jax.random.normal(kwq, (H, D, d_k), dtype=jnp.float32) * 0.1
    W_K = jax.random.normal(kwk, (H, D, d_k), dtype=jnp.float32) * 0.1
    W_V = jax.random.normal(kwv, (H, D, d_v), dtype=jnp.float32) * 0.1
    W_O = jax.random.normal(kwo, (H * d_v, D), dtype=jnp.float32) * 0.1

    out, attn = multi_head_attention(q, k, v, W_Q, W_K, W_V, W_O)
    out = jax.block_until_ready(out)
    attn = jax.block_until_ready(attn)

    out_ref, attn_ref = _reference(q, k, v, W_Q, W_K, W_V, W_O)
    # Tolerances slightly loosened vs. the previous version because the
    # softmax denominator uses the approximate EUP reciprocal.
    assert jnp.allclose(out, out_ref, atol=2e-3, rtol=2e-3), "output mismatch"
    assert jnp.allclose(attn, attn_ref, atol=2e-3, rtol=2e-3), "attention mismatch"

    print("KERNEL_OK")
</pallas_src>

<mosaic_0001>
module attributes {stable_mosaic.version = 11 : i64} {
  func.func @_mha_kernel(%arg0: i32, %arg1: i32, %arg2: memref<1x8x32xf32, #tpu.memory_space<vmem>>, %arg3: memref<1x8x32xf32, #tpu.memory_space<vmem>>, %arg4: memref<1x8x32xf32, #tpu.memory_space<vmem>>, %arg5: memref<32x64xf32, #tpu.memory_space<vmem>>, %arg6: memref<32x64xf32, #tpu.memory_space<vmem>>, %arg7: memref<32x64xf32, #tpu.memory_space<vmem>>, %arg8: memref<64x32xf32, #tpu.memory_space<vmem>>, %arg9: memref<1x8x32xf32, #tpu.memory_space<vmem>>, %arg10: memref<1x4x8x8xf32, #tpu.memory_space<vmem>>) attributes {dimension_semantics = [#tpu.dimension_semantics<parallel>, #tpu.dimension_semantics<parallel>], iteration_bounds = array<i64: 2, 1>, scalar_prefetch = 0 : i64, scratch_operands = 0 : i64, tpu.core_type = #tpu.core_type<tc>, window_params = [{transform_indices = @transform_0, window_bounds = array<i64: 1, 8, 32>}, {transform_indices = @transform_1, window_bounds = array<i64: 1, 8, 32>}, {transform_indices = @transform_2, window_bounds = array<i64: 1, 8, 32>}, {pipeline_mode = #tpu.pipeline_mode<synchronous>, transform_indices = @transform_3, window_bounds = array<i64: 32, 64>}, {pipeline_mode = #tpu.pipeline_mode<synchronous>, transform_indices = @transform_4, window_bounds = array<i64: 32, 64>}, {pipeline_mode = #tpu.pipeline_mode<synchronous>, transform_indices = @transform_5, window_bounds = array<i64: 32, 64>}, {pipeline_mode = #tpu.pipeline_mode<synchronous>, transform_indices = @transform_6, window_bounds = array<i64: 64, 32>}, {transform_indices = @transform_7, window_bounds = array<i64: 1, 8, 32>}, {transform_indices = @transform_8, window_bounds = array<i64: 1, 4, 8, 8>}]} {
    %c0 = arith.constant 0 : index
    %c0_0 = arith.constant 0 : index
    %c0_1 = arith.constant 0 : index
    %0 = vector.load %arg2[%c0, %c0_0, %c0_1] : memref<1x8x32xf32, #tpu.memory_space<vmem>>, vector<1x8x32xf32>
    %1 = vector.shape_cast %0 : vector<1x8x32xf32> to vector<8x32xf32>
    %c0_2 = arith.constant 0 : index
    %c0_3 = arith.constant 0 : index
    %c0_4 = arith.constant 0 : index
    %2 = vector.load %arg3[%c0_2, %c0_3, %c0_4] : memref<1x8x32xf32, #tpu.memory_space<vmem>>, vector<1x8x32xf32>
    %3 = vector.shape_cast %2 : vector<1x8x32xf32> to vector<8x32xf32>
    %c0_5 = arith.constant 0 : index
    %c0_6 = arith.constant 0 : index
    %c0_7 = arith.constant 0 : index
    %4 = vector.load %arg4[%c0_5, %c0_6, %c0_7] : memref<1x8x32xf32, #tpu.memory_space<vmem>>, vector<1x8x32xf32>
    %5 = vector.shape_cast %4 : vector<1x8x32xf32> to vector<8x32xf32>
    %c0_8 = arith.constant 0 : index
    %c0_9 = arith.constant 0 : index
    %6 = vector.load %arg5[%c0_8, %c0_9] : memref<32x64xf32, #tpu.memory_space<vmem>>, vector<32x64xf32>
    %cst = arith.constant dense<0.000000e+00> : vector<8x64xf32>
    %7 = tpu.matmul %1, %6, %cst {dimension_numbers = #tpu.dot_dimension_numbers<[1], [0], [0], [1], [0, 0, 1, 1], [], []>} : vector<8x32xf32>, vector<32x64xf32>, vector<8x64xf32> -> vector<8x64xf32>
    %c0_10 = arith.constant 0 : index
    %c0_11 = arith.constant 0 : index
    %8 = vector.load %arg6[%c0_10, %c0_11] : memref<32x64xf32, #tpu.memory_space<vmem>>, vector<32x64xf32>
    %cst_12 = arith.constant dense<0.000000e+00> : vector<8x64xf32>
    %9 = tpu.matmul %3, %8, %cst_12 {dimension_numbers = #tpu.dot_dimension_numbers<[1], [0], [0], [1], [0, 0, 1, 1], [], []>} : vector<8x32xf32>, vector<32x64xf32>, vector<8x64xf32> -> vector<8x64xf32>
    %c0_13 = arith.constant 0 : index
    %c0_14 = arith.constant 0 : index
    %10 = vector.load %arg7[%c0_13, %c0_14] : memref<32x64xf32, #tpu.memory_space<vmem>>, vector<32x64xf32>
    %cst_15 = arith.constant dense<0.000000e+00> : vector<8x64xf32>
    %11 = tpu.matmul %5, %10, %cst_15 {dimension_numbers = #tpu.dot_dimension_numbers<[1], [0], [0], [1], [0, 0, 1, 1], [], []>} : vector<8x32xf32>, vector<32x64xf32>, vector<8x64xf32> -> vector<8x64xf32>
    %12 = vector.extract_strided_slice %7 {offsets = [0, 0], sizes = [8, 16], strides = [1, 1]} : vector<8x64xf32> to vector<8x16xf32>
    %13 = vector.extract_strided_slice %9 {offsets = [0, 0], sizes = [8, 16], strides = [1, 1]} : vector<8x64xf32> to vector<8x16xf32>
    %14 = vector.extract_strided_slice %11 {offsets = [0, 0], sizes = [8, 16], strides = [1, 1]} : vector<8x64xf32> to vector<8x16xf32>
    %cst_16 = arith.constant dense<0.000000e+00> : vector<8x8xf32>
    %15 = tpu.matmul %12, %13, %cst_16 {dimension_numbers = #tpu.dot_dimension_numbers<[1], [1], [0], [0], [0, 0, 1, 0], [], []>} : vector<8x16xf32>, vector<8x16xf32>, vector<8x8xf32> -> vector<8x8xf32>
    %cst_17 = arith.constant dense<0xFF800000> : vector<8xf32>
    %16 = vector.multi_reduction <maximumf>, %15, %cst_17 [1] : vector<8x8xf32> to vector<8xf32>
    %17 = vector.shape_cast %16 : vector<8xf32> to vector<8x1xf32>
    %18 = vector.broadcast %17 : vector<8x1xf32> to vector<8x8xf32>
    %19 = arith.subf %15, %18 : vector<8x8xf32>
    %20 = math.exp %19 : vector<8x8xf32>
    %cst_18 = arith.constant dense<0.000000e+00> : vector<8xf32>
    %21 = vector.multi_reduction <add>, %20, %cst_18 [1] : vector<8x8xf32> to vector<8xf32>
    %22 = vector.shape_cast %21 : vector<8xf32> to vector<8x1xf32>
    %23 = tpu.reciprocal %22 {approx = true} : vector<8x1xf32> -> vector<8x1xf32>
    %24 = vector.broadcast %23 : vector<8x1xf32> to vector<8x8xf32>
    %25 = arith.mulf %20, %24 : vector<8x8xf32>
    %c0_19 = arith.constant 0 : index
    %c0_20 = arith.constant 0 : index
    %c0_21 = arith.constant 0 : index
    %c0_22 = arith.constant 0 : index
    %26 = vector.load %arg10[%c0_19, %c0_20, %c0_21, %c0_22] : memref<1x4x8x8xf32, #tpu.memory_space<vmem>>, vector<1x1x8x8xf32>
    %27 = vector.shape_cast %26 : vector<1x1x8x8xf32> to vector<8x8xf32>
    %28 = vector.shape_cast %25 : vector<8x8xf32> to vector<1x1x8x8xf32>
    tpu.vector_store %arg10[%c0_19, %c0_20, %c0_21, %c0_22], %28 {strides = array<i32>} : memref<1x4x8x8xf32, #tpu.memory_space<vmem>>, vector<1x1x8x8xf32>,
    %cst_23 = arith.constant dense<0.000000e+00> : vector<8x16xf32>
    %29 = tpu.matmul %25, %14, %cst_23 {dimension_numbers = #tpu.dot_dimension_numbers<[1], [0], [0], [1], [0, 0, 1, 1], [], []>} : vector<8x8xf32>, vector<8x16xf32>, vector<8x16xf32> -> vector<8x16xf32>
    %30 = vector.extract_strided_slice %7 {offsets = [0, 16], sizes = [8, 16], strides = [1, 1]} : vector<8x64xf32> to vector<8x16xf32>
    %31 = vector.extract_strided_slice %9 {offsets = [0, 16], sizes = [8, 16], strides = [1, 1]} : vector<8x64xf32> to vector<8x16xf32>
    %32 = vector.extract_strided_slice %11 {offsets = [0, 16], sizes = [8, 16], strides = [1, 1]} : vector<8x64xf32> to vector<8x16xf32>
    %cst_24 = arith.constant dense<0.000000e+00> : vector<8x8xf32>
    %33 = tpu.matmul %30, %31, %cst_24 {dimension_numbers = #tpu.dot_dimension_numbers<[1], [1], [0], [0], [0, 0, 1, 0], [], []>} : vector<8x16xf32>, vector<8x16xf32>, vector<8x8xf32> -> vector<8x8xf32>
    %cst_25 = arith.constant dense<0xFF800000> : vector<8xf32>
    %34 = vector.multi_reduction <maximumf>, %33, %cst_25 [1] : vector<8x8xf32> to vector<8xf32>
    %35 = vector.shape_cast %34 : vector<8xf32> to vector<8x1xf32>
    %36 = vector.broadcast %35 : vector<8x1xf32> to vector<8x8xf32>
    %37 = arith.subf %33, %36 : vector<8x8xf32>
    %38 = math.exp %37 : vector<8x8xf32>
    %cst_26 = arith.constant dense<0.000000e+00> : vector<8xf32>
    %39 = vector.multi_reduction <add>, %38, %cst_26 [1] : vector<8x8xf32> to vector<8xf32>
    %40 = vector.shape_cast %39 : vector<8xf32> to vector<8x1xf32>
    %41 = tpu.reciprocal %40 {approx = true} : vector<8x1xf32> -> vector<8x1xf32>
    %42 = vector.broadcast %41 : vector<8x1xf32> to vector<8x8xf32>
    %43 = arith.mulf %38, %42 : vector<8x8xf32>
    %c0_27 = arith.constant 0 : index
    %c1 = arith.constant 1 : index
    %c0_28 = arith.constant 0 : index
    %c0_29 = arith.constant 0 : index
    %44 = vector.load %arg10[%c0_27, %c1, %c0_28, %c0_29] : memref<1x4x8x8xf32, #tpu.memory_space<vmem>>, vector<1x1x8x8xf32>
    %45 = vector.shape_cast %44 : vector<1x1x8x8xf32> to vector<8x8xf32>
    %46 = vector.shape_cast %43 : vector<8x8xf32> to vector<1x1x8x8xf32>
    tpu.vector_store %arg10[%c0_27, %c1, %c0_28, %c0_29], %46 {strides = array<i32>} : memref<1x4x8x8xf32, #tpu.memory_space<vmem>>, vector<1x1x8x8xf32>,
    %cst_30 = arith.constant dense<0.000000e+00> : vector<8x16xf32>
    %47 = tpu.matmul %43, %32, %cst_30 {dimension_numbers = #tpu.dot_dimension_numbers<[1], [0], [0], [1], [0, 0, 1, 1], [], []>} : vector<8x8xf32>, vector<8x16xf32>, vector<8x16xf32> -> vector<8x16xf32>
    %48 = vector.extract_strided_slice %7 {offsets = [0, 32], sizes = [8, 16], strides = [1, 1]} : vector<8x64xf32> to vector<8x16xf32>
    %49 = vector.extract_strided_slice %9 {offsets = [0, 32], sizes = [8, 16], strides = [1, 1]} : vector<8x64xf32> to vector<8x16xf32>
    %50 = vector.extract_strided_slice %11 {offsets = [0, 32], sizes = [8, 16], strides = [1, 1]} : vector<8x64xf32> to vector<8x16xf32>
    %cst_31 = arith.constant dense<0.000000e+00> : vector<8x8xf32>
    %51 = tpu.matmul %48, %49, %cst_31 {dimension_numbers = #tpu.dot_dimension_numbers<[1], [1], [0], [0], [0, 0, 1, 0], [], []>} : vector<8x16xf32>, vector<8x16xf32>, vector<8x8xf32> -> vector<8x8xf32>
    %cst_32 = arith.constant dense<0xFF800000> : vector<8xf32>
    %52 = vector.multi_reduction <maximumf>, %51, %cst_32 [1] : vector<8x8xf32> to vector<8xf32>
    %53 = vector.shape_cast %52 : vector<8xf32> to vector<8x1xf32>
    %54 = vector.broadcast %53 : vector<8x1xf32> to vector<8x8xf32>
    %55 = arith.subf %51, %54 : vector<8x8xf32>
    %56 = math.exp %55 : vector<8x8xf32>
    %cst_33 = arith.constant dense<0.000000e+00> : vector<8xf32>
    %57 = vector.multi_reduction <add>, %56, %cst_33 [1] : vector<8x8xf32> to vector<8xf32>
    %58 = vector.shape_cast %57 : vector<8xf32> to vector<8x1xf32>
    %59 = tpu.reciprocal %58 {approx = true} : vector<8x1xf32> -> vector<8x1xf32>
    %60 = vector.broadcast %59 : vector<8x1xf32> to vector<8x8xf32>
    %61 = arith.mulf %56, %60 : vector<8x8xf32>
    %c0_34 = arith.constant 0 : index
    %c2 = arith.constant 2 : index
    %c0_35 = arith.constant 0 : index
    %c0_36 = arith.constant 0 : index
    %62 = vector.load %arg10[%c0_34, %c2, %c0_35, %c0_36] : memref<1x4x8x8xf32, #tpu.memory_space<vmem>>, vector<1x1x8x8xf32>
    %63 = vector.shape_cast %62 : vector<1x1x8x8xf32> to vector<8x8xf32>
    %64 = vector.shape_cast %61 : vector<8x8xf32> to vector<1x1x8x8xf32>
    tpu.vector_store %arg10[%c0_34, %c2, %c0_35, %c0_36], %64 {strides = array<i32>} : memref<1x4x8x8xf32, #tpu.memory_space<vmem>>, vector<1x1x8x8xf32>,
    %cst_37 = arith.constant dense<0.000000e+00> : vector<8x16xf32>
    %65 = tpu.matmul %61, %50, %cst_37 {dimension_numbers = #tpu.dot_dimension_numbers<[1], [0], [0], [1], [0, 0, 1, 1], [], []>} : vector<8x8xf32>, vector<8x16xf32>, vector<8x16xf32> -> vector<8x16xf32>
    %66 = vector.extract_strided_slice %7 {offsets = [0, 48], sizes = [8, 16], strides = [1, 1]} : vector<8x64xf32> to vector<8x16xf32>
    %67 = vector.extract_strided_slice %9 {offsets = [0, 48], sizes = [8, 16], strides = [1, 1]} : vector<8x64xf32> to vector<8x16xf32>
    %68 = vector.extract_strided_slice %11 {offsets = [0, 48], sizes = [8, 16], strides = [1, 1]} : vector<8x64xf32> to vector<8x16xf32>
    %cst_38 = arith.constant dense<0.000000e+00> : vector<8x8xf32>
    %69 = tpu.matmul %66, %67, %cst_38 {dimension_numbers = #tpu.dot_dimension_numbers<[1], [1], [0], [0], [0, 0, 1, 0], [], []>} : vector<8x16xf32>, vector<8x16xf32>, vector<8x8xf32> -> vector<8x8xf32>
    %cst_39 = arith.constant dense<0xFF800000> : vector<8xf32>
    %70 = vector.multi_reduction <maximumf>, %69, %cst_39 [1] : vector<8x8xf32> to vector<8xf32>
    %71 = vector.shape_cast %70 : vector<8xf32> to vector<8x1xf32>
    %72 = vector.broadcast %71 : vector<8x1xf32> to vector<8x8xf32>
    %73 = arith.subf %69, %72 : vector<8x8xf32>
    %74 = math.exp %73 : vector<8x8xf32>
    %cst_40 = arith.constant dense<0.000000e+00> : vector<8xf32>
    %75 = vector.multi_reduction <add>, %74, %cst_40 [1] : vector<8x8xf32> to vector<8xf32>
    %76 = vector.shape_cast %75 : vector<8xf32> to vector<8x1xf32>
    %77 = tpu.reciprocal %76 {approx = true} : vector<8x1xf32> -> vector<8x1xf32>
    %78 = vector.broadcast %77 : vector<8x1xf32> to vector<8x8xf32>
    %79 = arith.mulf %74, %78 : vector<8x8xf32>
    %c0_41 = arith.constant 0 : index
    %c3 = arith.constant 3 : index
    %c0_42 = arith.constant 0 : index
    %c0_43 = arith.constant 0 : index
    %80 = vector.load %arg10[%c0_41, %c3, %c0_42, %c0_43] : memref<1x4x8x8xf32, #tpu.memory_space<vmem>>, vector<1x1x8x8xf32>
    %81 = vector.shape_cast %80 : vector<1x1x8x8xf32> to vector<8x8xf32>
    %82 = vector.shape_cast %79 : vector<8x8xf32> to vector<1x1x8x8xf32>
    tpu.vector_store %arg10[%c0_41, %c3, %c0_42, %c0_43], %82 {strides = array<i32>} : memref<1x4x8x8xf32, #tpu.memory_space<vmem>>, vector<1x1x8x8xf32>,
    %cst_44 = arith.constant dense<0.000000e+00> : vector<8x16xf32>
    %83 = tpu.matmul %79, %68, %cst_44 {dimension_numbers = #tpu.dot_dimension_numbers<[1], [0], [0], [1], [0, 0, 1, 1], [], []>} : vector<8x8xf32>, vector<8x16xf32>, vector<8x16xf32> -> vector<8x16xf32>
    %84 = tpu.concatenate %29, %47, %65, %83 in 1 : vector<8x16xf32>, vector<8x16xf32>, vector<8x16xf32>, vector<8x16xf32> -> vector<8x64xf32>
    %c0_45 = arith.constant 0 : index
    %c0_46 = arith.constant 0 : index
    %85 = vector.load %arg8[%c0_45, %c0_46] : memref<64x32xf32, #tpu.memory_space<vmem>>, vector<64x32xf32>
    %cst_47 = arith.constant dense<0.000000e+00> : vector<8x32xf32>
    %86 = tpu.matmul %84, %85, %cst_47 {dimension_numbers = #tpu.dot_dimension_numbers<[1], [0], [0], [1], [0, 0, 1, 1], [], []>} : vector<8x64xf32>, vector<64x32xf32>, vector<8x32xf32> -> vector<8x32xf32>
    %c0_48 = arith.constant 0 : index
    %c0_49 = arith.constant 0 : index
    %c0_50 = arith.constant 0 : index
    %87 = vector.load %arg9[%c0_48, %c0_49, %c0_50] : memref<1x8x32xf32, #tpu.memory_space<vmem>>, vector<1x8x32xf32>
    %88 = vector.shape_cast %87 : vector<1x8x32xf32> to vector<8x32xf32>
    %89 = vector.shape_cast %86 : vector<8x32xf32> to vector<1x8x32xf32>
    tpu.vector_store %arg9[%c0_48, %c0_49, %c0_50], %89 {strides = array<i32>} : memref<1x8x32xf32, #tpu.memory_space<vmem>>, vector<1x8x32xf32>,
    return
  }
  func.func @transform_0(%arg0: i32, %arg1: i32) -> (i32, i32, i32) {
    %c0_i32 = arith.constant 0 : i32
    %c0_i32_0 = arith.constant 0 : i32
    return %arg0, %arg1, %c0_i32 : i32, i32, i32
  }
  func.func @transform_1(%arg0: i32, %arg1: i32) -> (i32, i32, i32) {
    %c0_i32 = arith.constant 0 : i32
    %c0_i32_0 = arith.constant 0 : i32
    %c0_i32_1 = arith.constant 0 : i32
    return %arg0, %c0_i32, %c0_i32_0 : i32, i32, i32
  }
  func.func @transform_2(%arg0: i32, %arg1: i32) -> (i32, i32, i32) {
    %c0_i32 = arith.constant 0 : i32
    %c0_i32_0 = arith.constant 0 : i32
    %c0_i32_1 = arith.constant 0 : i32
    return %arg0, %c0_i32, %c0_i32_0 : i32, i32, i32
  }
  func.func @transform_3(%arg0: i32, %arg1: i32) -> (i32, i32) {
    %c0_i32 = arith.constant 0 : i32
    %c0_i32_0 = arith.constant 0 : i32
    %c0_i32_1 = arith.constant 0 : i32
    return %c0_i32, %c0_i32_0 : i32, i32
  }
  func.func @transform_4(%arg0: i32, %arg1: i32) -> (i32, i32) {
    %c0_i32 = arith.constant 0 : i32
    %c0_i32_0 = arith.constant 0 : i32
    %c0_i32_1 = arith.constant 0 : i32
    return %c0_i32, %c0_i32_0 : i32, i32
  }
  func.func @transform_5(%arg0: i32, %arg1: i32) -> (i32, i32) {
    %c0_i32 = arith.constant 0 : i32
    %c0_i32_0 = arith.constant 0 : i32
    %c0_i32_1 = arith.constant 0 : i32
    return %c0_i32, %c0_i32_0 : i32, i32
  }
  func.func @transform_6(%arg0: i32, %arg1: i32) -> (i32, i32) {
    %c0_i32 = arith.constant 0 : i32
    %c0_i32_0 = arith.constant 0 : i32
    %c0_i32_1 = arith.constant 0 : i32
    return %c0_i32, %c0_i32_0 : i32, i32
  }
  func.func @transform_7(%arg0: i32, %arg1: i32) -> (i32, i32, i32) {
    %c0_i32 = arith.constant 0 : i32
    %c0_i32_0 = arith.constant 0 : i32
    return %arg0, %arg1, %c0_i32 : i32, i32, i32
  }
  func.func @transform_8(%arg0: i32, %arg1: i32) -> (i32, i32, i32, i32) {
    %c0_i32 = arith.constant 0 : i32
    %c0_i32_0 = arith.constant 0 : i32
    %c0_i32_1 = arith.constant 0 : i32
    return %arg0, %c0_i32, %arg1, %c0_i32_0 : i32, i32, i32, i32
  }
}

</mosaic_0001>

<llo_original>
// kernel: tpu_custom_call.1
$region0: #{tpu_custom_call.1}
  #allocation0 [shape = 'u32[]', space=smem, size = 0x4, offset = 0x4, fixed_abs, tag = 'smem constant byte address 0x4 - core index']
  #allocation1 [shape = 'u32[144,128]{1,0:T(1,128)}', space=vmem, size = 0x12000, scoped, tag = 'internal scratch']
  %s0 = inlined_call_operand.hbm [shape: f32[2,8,32], index: 0, kind: input, shape index: {}]
  %s1 = inlined_call_operand.hbm [shape: f32[2,8,32], index: 1, kind: input, shape index: {}]
  %s2 = inlined_call_operand.hbm [shape: f32[2,8,32], index: 2, kind: input, shape index: {}]
  %s3 = inlined_call_operand.vmem [shape: f32[32,64], index: 3, kind: input, shape index: {}]
  %s4 = inlined_call_operand.vmem [shape: f32[32,64], index: 4, kind: input, shape index: {}]
  %s5 = inlined_call_operand.vmem [shape: f32[32,64], index: 5, kind: input, shape index: {}]
  %s6 = inlined_call_operand.vmem [shape: f32[64,32], index: 6, kind: input, shape index: {}]
  %s7 = inlined_call_operand.hbm [shape: f32[2,8,32], index: 7, kind: output, shape index: {0}]
  %s8 = inlined_call_operand.hbm [shape: f32[2,4,8,8], index: 8, kind: output, shape index: {1}]
  %9 = xla_tuple %s7, %s8
  %s10 = sld [smem:[#allocation0]]
  $region81: #{tpu_custom_call.1} parent=0
    _
  %s12 = ssub.s32 1, %s10
  %s13 = scalar_select 0, %s12, %s10
  $region1: #{tpu_custom_call.1} parent=0
    #allocation2 [shape = 'u8[8192]{0}', space=vmem, size = 0x2000, scoped, tag = 'input window, operand 0']
    #allocation3 [shape = 's32[2]{0}', space=sflag, size = 0x8, scoped, tag = 'scoped memory for tpu_custom_call.1']
    #allocation4 [shape = 's32[2]{0}', space=sflag, size = 0x8, scoped, tag = 'scoped memory for tpu_custom_call.1']
    #allocation5 [shape = 'u8[8192]{0}', space=vmem, size = 0x2000, scoped, tag = 'input window, operand 1']
    #allocation6 [shape = 's32[2]{0}', space=sflag, size = 0x8, scoped, tag = 'scoped memory for tpu_custom_call.1']
    #allocation7 [shape = 'u8[8192]{0}', space=vmem, size = 0x2000, scoped, tag = 'input window, operand 2']
    #allocation8 [shape = 'u8[8192]{0}', space=vmem, size = 0x2000, scoped, tag = 'output window, operand 0']
    #allocation9 [shape = 'u8[32768]{0}', space=vmem, size = 0x8000, scoped, tag = 'output window, operand 1']
    #allocation10 [shape = 's32[2]{0}', space=sflag, size = 0x8, scoped, tag = 'scoped memory for tpu_custom_call.1']
    %14 = vsyncpa [#allocation3], 0
    %s15 = scalar_lea.sflag [#allocation3], 1
    %16 = vsyncpa %s15, 0
    %17 = vsyncpa [#allocation6], 0
    %s18 = scalar_lea.sflag [#allocation6], 1
    %19 = vsyncpa %s18, 0
    %20 = vsyncpa [#allocation4], 0
    %s21 = scalar_lea.sflag [#allocation4], 1
    %22 = vsyncpa %s21, 0
    %23 = vsyncpa [#allocation10], 0
    %s24 = scalar_lea.sflag [#allocation10], 1
    %25 = vsyncpa %s24, 0
    loop: start=0, step=1, limit=4
    $region2: #{tpu_custom_call.1} parent=1 // loop_pre_header
      _
    $region3: #{tpu_custom_call.1} parent=1 // loop_header
      %s27 = sphi 0, %s31
      %p28 = scmp.ge.s32.totalorder %s27, 4
      %s34 = sphi 0, %s46
      %s35 = sphi 0, %s42
      %s36 = sphi 0, %s34
      %s37 = sphi 0, %s35
      %s38 = sphi 0, %s36
      %s39 = sphi 0, %s37
      %s51 = sphi 0, %s53
      %s54 = sphi 0, %s51
      %s55 = sphi 0, %s54
      %s71 = sphi 0, %s55
      %s77 = sphi 0, %s79
      %s80 = sphi 0, %s77
      %s81 = sphi 0, %s80
      %s97 = sphi 0, %s81
      %s103 = sphi 0, %s105
      %s106 = sphi 0, %s103
      %s107 = sphi 0, %s106
      %s123 = sphi 0, %s107
      %s127 = sphi 0, %s127
      %s129 = sphi 0, %s127
      %s130 = sphi 0, %s129
      %s144 = sphi 0, %s130
      %s148 = sphi 0, %s148
      %s150 = sphi 0, %s148
      %s151 = sphi 0, %s150
      %s165 = sphi 0, %s151
      %s169 = sphi 0, %s169
      %s171 = sphi 0, %s169
      %s172 = sphi 0, %s171
      %s186 = sphi 0, %s172
      %s190 = sphi 0, %s190
      %s192 = sphi 0, %s190
      %s193 = sphi 0, %s192
      %s207 = sphi 0, %s193
      %s215 = sphi 0, %s217
      %s218 = sphi 0, %s215
      %s219 = sphi 0, %s218
      %s235 = sphi 0, %s219
      %s243 = sphi 0, %s245
      %s246 = sphi 0, %s243
      %s247 = sphi 0, %s246
      %s263 = sphi 0, %s247
    $region4: #{tpu_custom_call.1} parent=1 // loop_header_branch
      %30 = sbr.rel (%p28) target = $region8
    $region5: #{tpu_custom_call.1} parent=1 // loop_body
      %s32 = ssub.s32 %s27, 1
      %s33 = ssub.s32 %s27, 2
      %s40 = sadd.s32 1, %s35
      %p41 = scmp.ge.s32.totalorder %s40, 1
      %s42 = scalar_select %p41, 0, %s40
      %s43 = sadd.s32 1, %s34
      %s44 = scalar_select %p41, %s43, %s34
      %p45 = scmp.ge.s32.totalorder %s44, 2
      %s46 = scalar_select %p45, 0, %s44
      %s47 = ssub.s32 %s34, %s46
      %s48 = ssub.s32 %s35, %s42
      %s49 = sor.u32 %s47, %s48
      %p50 = scmp.eq.s32.totalorder %s49, 0
      %s52 = sadd.s32 %s51, 1
      %s53 = scalar_select %p50, %s51, %s52
      %p56 = pneg %p50
      %p57 = scmp.eq.s32.totalorder %s27, 1
      %p58 = por %p56, %p57
      %p59 = scmp.ne.s32.totalorder %s51, %s54
      %p60 = scmp.eq.s32.totalorder %s27, 0
      %p61 = por %p59, %p60
      %p62 = scmp.ne.s32.totalorder %s51, %s54
      %p63 = scmp.eq.s32.totalorder %s32, 1
      %p64 = por %p62, %p63
      %p65 = scmp.ne.s32.totalorder %s54, %s55
      %p66 = scmp.eq.s32.totalorder %s32, 0
      %p67 = por %p65, %p66
      %p68 = scmp.ne.s32.totalorder %s54, %s55
      %p69 = scmp.eq.s32.totalorder %s33, 1
      %p70 = por %p68, %p69
      %p72 = scmp.ne.s32.totalorder %s55, %s71
      %p73 = scmp.eq.s32.totalorder %s33, 0
      %p74 = por %p72, %p73
      %s75 = ssub.s32 %s34, %s46
      %p76 = scmp.eq.s32.totalorder %s75, 0
      %s78 = sadd.s32 %s77, 1
      %s79 = scalar_select %p76, %s77, %s78
      %p82 = pneg %p76
      %p83 = scmp.eq.s32.totalorder %s27, 1
      %p84 = por %p82, %p83
      %p85 = scmp.ne.s32.totalorder %s77, %s80
      %p86 = scmp.eq.s32.totalorder %s27, 0
      %p87 = por %p85, %p86
      %p88 = scmp.ne.s32.totalorder %s77, %s80
      %p89 = scmp.eq.s32.totalorder %s32, 1
      %p90 = por %p88, %p89
      %p91 = scmp.ne.s32.totalorder %s80, %s81
      %p92 = scmp.eq.s32.totalorder %s32, 0
      %p93 = por %p91, %p92
      %p94 = scmp.ne.s32.totalorder %s80, %s81
      %p95 = scmp.eq.s32.totalorder %s33, 1
      %p96 = por %p94, %p95
      %p98 = scmp.ne.s32.totalorder %s81, %s97
      %p99 = scmp.eq.s32.totalorder %s33, 0
      %p100 = por %p98, %p99
      %s101 = ssub.s32 %s34, %s46
      %p102 = scmp.eq.s32.totalorder %s101, 0
      %s104 = sadd.s32 %s103, 1
      %s105 = scalar_select %p102, %s103, %s104
      %p108 = pneg %p102
      %p109 = scmp.eq.s32.totalorder %s27, 1
      %p110 = por %p108, %p109
      %p111 = scmp.ne.s32.totalorder %s103, %s106
      %p112 = scmp.eq.s32.totalorder %s27, 0
      %p113 = por %p111, %p112
      %p114 = scmp.ne.s32.totalorder %s103, %s106
      %p115 = scmp.eq.s32.totalorder %s32, 1
      %p116 = por %p114, %p115
      %p117 = scmp.ne.s32.totalorder %s106, %s107
      %p118 = scmp.eq.s32.totalorder %s32, 0
      %p119 = por %p117, %p118
      %p120 = scmp.ne.s32.totalorder %s106, %s107
      %p121 = scmp.eq.s32.totalorder %s33, 1
      %p122 = por %p120, %p121
      %p124 = scmp.ne.s32.totalorder %s107, %s123
      %p125 = scmp.eq.s32.totalorder %s33, 0
      %p126 = por %p124, %p125
      %s128 = sadd.s32 %s127, 1
      %p131 = scmp.eq.s32.totalorder %s27, 1
      %p132 = scmp.ne.s32.totalorder %s127, %s129
      %p133 = scmp.eq.s32.totalorder %s27, 0
      %p134 = por %p132, %p133
      %p135 = scmp.ne.s32.totalorder %s127, %s129
      %p136 = scmp.eq.s32.totalorder %s32, 1
      %p137 = por %p135, %p136
      %p138 = scmp.ne.s32.totalorder %s129, %s130
      %p139 = scmp.eq.s32.totalorder %s32, 0
      %p140 = por %p138, %p139
      %p141 = scmp.ne.s32.totalorder %s129, %s130
      %p142 = scmp.eq.s32.totalorder %s33, 1
      %p143 = por %p141, %p142
      %p145 = scmp.ne.s32.totalorder %s130, %s144
      %p146 = scmp.eq.s32.totalorder %s33, 0
      %p147 = por %p145, %p146
      %s149 = sadd.s32 %s148, 1
      %p152 = scmp.eq.s32.totalorder %s27, 1
      %p153 = scmp.ne.s32.totalorder %s148, %s150
      %p154 = scmp.eq.s32.totalorder %s27, 0
      %p155 = por %p153, %p154
      %p156 = scmp.ne.s32.totalorder %s148, %s150
      %p157 = scmp.eq.s32.totalorder %s32, 1
      %p158 = por %p156, %p157
      %p159 = scmp.ne.s32.totalorder %s150, %s151
      %p160 = scmp.eq.s32.totalorder %s32, 0
      %p161 = por %p159, %p160
      %p162 = scmp.ne.s32.totalorder %s150, %s151
      %p163 = scmp.eq.s32.totalorder %s33, 1
      %p164 = por %p162, %p163
      %p166 = scmp.ne.s32.totalorder %s151, %s165
      %p167 = scmp.eq.s32.totalorder %s33, 0
      %p168 = por %p166, %p167
      %s170 = sadd.s32 %s169, 1
      %p173 = scmp.eq.s32.totalorder %s27, 1
      %p174 = scmp.ne.s32.totalorder %s169, %s171
      %p175 = scmp.eq.s32.totalorder %s27, 0
      %p176 = por %p174, %p175
      %p177 = scmp.ne.s32.totalorder %s169, %s171
      %p178 = scmp.eq.s32.totalorder %s32, 1
      %p179 = por %p177, %p178
      %p180 = scmp.ne.s32.totalorder %s171, %s172
      %p181 = scmp.eq.s32.totalorder %s32, 0
      %p182 = por %p180, %p181
      %p183 = scmp.ne.s32.totalorder %s171, %s172
      %p184 = scmp.eq.s32.totalorder %s33, 1
      %p185 = por %p183, %p184
      %p187 = scmp.ne.s32.totalorder %s172, %s186
      %p188 = scmp.eq.s32.totalorder %s33, 0
      %p189 = por %p187, %p188
      %s191 = sadd.s32 %s190, 1
      %p194 = scmp.eq.s32.totalorder %s27, 1
      %p195 = scmp.ne.s32.totalorder %s190, %s192
      %p196 = scmp.eq.s32.totalorder %s27, 0
      %p197 = por %p195, %p196
      %p198 = scmp.ne.s32.totalorder %s190, %s192
      %p199 = scmp.eq.s32.totalorder %s32, 1
      %p200 = por %p198, %p199
      %p201 = scmp.ne.s32.totalorder %s192, %s193
      %p202 = scmp.eq.s32.totalorder %s32, 0
      %p203 = por %p201, %p202
      %p204 = scmp.ne.s32.totalorder %s192, %s193
      %p205 = scmp.eq.s32.totalorder %s33, 1
      %p206 = por %p204, %p205
      %p208 = scmp.ne.s32.totalorder %s193, %s207
      %p209 = scmp.eq.s32.totalorder %s33, 0
      %p210 = por %p208, %p209
      %s211 = ssub.s32 %s34, %s46
      %s212 = ssub.s32 %s35, %s42
      %s213 = sor.u32 %s211, %s212
      %p214 = scmp.eq.s32.totalorder %s213, 0
      %s216 = sadd.s32 %s215, 1
      %s217 = scalar_select %p214, %s215, %s216
      %p220 = pneg %p214
      %p221 = scmp.eq.s32.totalorder %s27, 1
      %p222 = por %p220, %p221
      %p223 = scmp.ne.s32.totalorder %s215, %s218
      %p224 = scmp.eq.s32.totalorder %s27, 0
      %p225 = por %p223, %p224
      %p226 = scmp.ne.s32.totalorder %s215, %s218
      %p227 = scmp.eq.s32.totalorder %s32, 1
      %p228 = por %p226, %p227
      %p229 = scmp.ne.s32.totalorder %s218, %s219
      %p230 = scmp.eq.s32.totalorder %s32, 0
      %p231 = por %p229, %p230
      %p232 = scmp.ne.s32.totalorder %s218, %s219
      %p233 = scmp.eq.s32.totalorder %s33, 1
      %p234 = por %p232, %p233
      %p236 = scmp.ne.s32.totalorder %s219, %s235
      %p237 = scmp.eq.s32.totalorder %s33, 0
      %p238 = por %p236, %p237
      %s239 = ssub.s32 %s34, %s46
      %s240 = ssub.s32 %s35, %s42
      %s241 = sor.u32 %s239, %s240
      %p242 = scmp.eq.s32.totalorder %s241, 0
      %s244 = sadd.s32 %s243, 1
      %s245 = scalar_select %p242, %s243, %s244
      %p248 = pneg %p242
      %p249 = scmp.eq.s32.totalorder %s27, 1
      %p250 = por %p248, %p249
      %p251 = scmp.ne.s32.totalorder %s243, %s246
      %p252 = scmp.eq.s32.totalorder %s27, 0
      %p253 = por %p251, %p252
      %p254 = scmp.ne.s32.totalorder %s243, %s246
      %p255 = scmp.eq.s32.totalorder %s32, 1
      %p256 = por %p254, %p255
      %p257 = scmp.ne.s32.totalorder %s246, %s247
      %p258 = scmp.eq.s32.totalorder %s32, 0
      %p259 = por %p257, %p258
      %p260 = scmp.ne.s32.totalorder %s246, %s247
      %p261 = scmp.eq.s32.totalorder %s33, 1
      %p262 = por %p260, %p261
      %p264 = scmp.ne.s32.totalorder %s247, %s263
      %p265 = scmp.eq.s32.totalorder %s33, 0
      %p266 = por %p264, %p265
      %p267 = scmp.le.s32.totalorder 1, %s27
      %p268 = scmp.lt.s32.totalorder %s27, 3
      %p269 = pnand %p267, %p268
      %p270 = pneg %p269
      // Predicated region
      $region9: #{tpu_custom_call.1} parent=5 // pred_check
        _
      $region10: #{tpu_custom_call.1} parent=5 // pred_check_branch
        %272 = sbr.rel (%p269) target = $region12
      $region11: #{tpu_custom_call.1} parent=5 // pred_region
        %s273 = ssub.s32 %s27, 1
        // Predicated region
        $region13: #{tpu_custom_call.1} parent=11 // pred_check
          %p274 = pneg %p140
        $region14: #{tpu_custom_call.1} parent=11 // pred_check_branch
          %276 = sbr.rel (%p274) target = $region16
        $region15: #{tpu_custom_call.1} parent=11 // pred_region
          _
        $region16: #{tpu_custom_call.1} parent=11 // pred_fallthru
          _
        // Predicated region
        $region17: #{tpu_custom_call.1} parent=11 // pred_check
          %p277 = pneg %p161
        $region18: #{tpu_custom_call.1} parent=11 // pred_check_branch
          %279 = sbr.rel (%p277) target = $region20
        $region19: #{tpu_custom_call.1} parent=11 // pred_region
          _
        $region20: #{tpu_custom_call.1} parent=11 // pred_fallthru
          _
        // Predicated region
        $region21: #{tpu_custom_call.1} parent=11 // pred_check
          %p280 = pneg %p182
        $region22: #{tpu_custom_call.1} parent=11 // pred_check_branch
          %282 = sbr.rel (%p280) target = $region24
        $region23: #{tpu_custom_call.1} parent=11 // pred_region
          _
        $region24: #{tpu_custom_call.1} parent=11 // pred_fallthru
          _
        // Predicated region
        $region25: #{tpu_custom_call.1} parent=11 // pred_check
          %p283 = pneg %p203
        $region26: #{tpu_custom_call.1} parent=11 // pred_check_branch
          %285 = sbr.rel (%p283) target = $region28
        $region27: #{tpu_custom_call.1} parent=11 // pred_region
          _
        $region28: #{tpu_custom_call.1} parent=11 // pred_fallthru
          _
      $region12: #{tpu_custom_call.1} parent=5 // pred_fallthru
        _
      %p286 = scmp.lt.s32.totalorder %s27, 2
      // Predicated region
      $region29: #{tpu_custom_call.1} parent=5 // pred_check
        %p287 = pneg %p286
      $region30: #{tpu_custom_call.1} parent=5 // pred_check_branch
        %289 = sbr.rel (%p287) target = $region32
      $region31: #{tpu_custom_call.1} parent=5 // pred_region
        // Predicated region
        $region33: #{tpu_custom_call.1} parent=31 // pred_check
          %p290 = pneg %p61
        $region34: #{tpu_custom_call.1} parent=31 // pred_check_branch
          %292 = sbr.rel (%p290) target = $region36
        $region35: #{tpu_custom_call.1} parent=31 // pred_region
          %s293 = sand.u32 %s51, 1
          %s294 = scalar_lea.sflag [#allocation3], %s293
          %s295 = sand.u32 %s51, 1
          %s296 = smul.addr %s295, 8
          %s297 = scalar_lea.vmem [#allocation2], %s296
          %s299 = ssub.s32 128, 128
          %300 = vsyncadd %s294, %s299
          %s301 = sadd.s32 %s35, %s34
          %s302 = smul.addr %s301, 128
          %s303 = scalar_lea.hbm %s0, %s302
          %s305 = sshll.u32 %s297, 4
          %s306 = int_to_ptr.vmem [resolvable:$true] %s305
          %308 = dma.hbm_to_vmem [thread:$0]  %s303, 128, %s306, %s294
        $region36: #{tpu_custom_call.1} parent=31 // pred_fallthru
          _
        // Predicated region
        $region37: #{tpu_custom_call.1} parent=31 // pred_check
          %p309 = pneg %p87
        $region38: #{tpu_custom_call.1} parent=31 // pred_check_branch
          %311 = sbr.rel (%p309) target = $region40
        $region39: #{tpu_custom_call.1} parent=31 // pred_region
          %s312 = sand.u32 %s27, 1
          %s313 = scalar_lea.sflag [#allocation6], %s312
          %s314 = sand.u32 %s77, 1
          %s315 = smul.addr %s314, 8
          %s316 = scalar_lea.vmem [#allocation5], %s315
          %s318 = ssub.s32 128, 128
          %319 = vsyncadd %s313, %s318
          %s320 = smul.addr %s34, 128
          %s321 = scalar_lea.hbm %s1, %s320
          %s323 = sshll.u32 %s316, 4
          %s324 = int_to_ptr.vmem [resolvable:$true] %s323
          %326 = dma.hbm_to_vmem [thread:$0]  %s321, 128, %s324, %s313
        $region40: #{tpu_custom_call.1} parent=31 // pred_fallthru
          _
        // Predicated region
        $region41: #{tpu_custom_call.1} parent=31 // pred_check
          %p327 = pneg %p113
        $region42: #{tpu_custom_call.1} parent=31 // pred_check_branch
          %329 = sbr.rel (%p327) target = $region44
        $region43: #{tpu_custom_call.1} parent=31 // pred_region
          %s330 = sand.u32 %s27, 1
          %s331 = scalar_lea.sflag [#allocation6], %s330
          %s332 = sand.u32 %s103, 1
          %s333 = smul.addr %s332, 8
          %s334 = scalar_lea.vmem [#allocation7], %s333
          %s336 = ssub.s32 128, 128
          %337 = vsyncadd %s331, %s336
          %s338 = smul.addr %s34, 128
          %s339 = scalar_lea.hbm %s2, %s338
          %s341 = sshll.u32 %s334, 4
          %s342 = int_to_ptr.vmem [resolvable:$true] %s341
          %344 = dma.hbm_to_vmem [thread:$0]  %s339, 128, %s342, %s331
        $region44: #{tpu_custom_call.1} parent=31 // pred_fallthru
          _
      $region32: #{tpu_custom_call.1} parent=5 // pred_fallthru
        _
      %p345 = scmp.le.s32.totalorder 1, %s27
      %p346 = scmp.lt.s32.totalorder %s27, 3
      %p347 = pnand %p345, %p346
      %p348 = pneg %p347
      // Predicated region
      $region45: #{tpu_custom_call.1} parent=5 // pred_check
        _
      $region46: #{tpu_custom_call.1} parent=5 // pred_check_branch
        %350 = sbr.rel (%p347) target = $region48
      $region47: #{tpu_custom_call.1} parent=5 // pred_region
        %s351 = ssub.s32 %s27, 1
        %s352 = sand.u32 %s54, 1
        %s353 = scalar_lea.sflag [#allocation3], %s352
        %s354 = sand.u32 %s54, 1
        %s355 = smul.addr %s354, 8
        %s356 = scalar_lea.vmem [#allocation2], %s355
        // Predicated region
        $region49: #{tpu_custom_call.1} parent=47 // pred_check
          %p357 = pneg %p67
        $region50: #{tpu_custom_call.1} parent=47 // pred_check_branch
          %359 = sbr.rel (%p357) target = $region52
        $region51: #{tpu_custom_call.1} parent=47 // pred_region
          %360 = dma.done %s353, 128
        $region52: #{tpu_custom_call.1} parent=47 // pred_fallthru
          _
        %s361 = sand.u32 %s32, 1
        %s362 = scalar_lea.sflag [#allocation6], %s361
        %s363 = sand.u32 %s80, 1
        %s364 = smul.addr %s363, 8
        %s365 = scalar_lea.vmem [#allocation5], %s364
        // Predicated region
        $region53: #{tpu_custom_call.1} parent=47 // pred_check
          %p366 = pneg %p93
        $region54: #{tpu_custom_call.1} parent=47 // pred_check_branch
          %368 = sbr.rel (%p366) target = $region56
        $region55: #{tpu_custom_call.1} parent=47 // pred_region
          %369 = dma.done %s362, 128
        $region56: #{tpu_custom_call.1} parent=47 // pred_fallthru
          _
        %s370 = sand.u32 %s32, 1
        %s371 = scalar_lea.sflag [#allocation6], %s370
        %s372 = sand.u32 %s106, 1
        %s373 = smul.addr %s372, 8
        %s374 = scalar_lea.vmem [#allocation7], %s373
        // Predicated region
        $region57: #{tpu_custom_call.1} parent=47 // pred_check
          %p375 = pneg %p119
        $region58: #{tpu_custom_call.1} parent=47 // pred_check_branch
          %377 = sbr.rel (%p375) target = $region60
        $region59: #{tpu_custom_call.1} parent=47 // pred_region
          %378 = dma.done %s371, 128
        $region60: #{tpu_custom_call.1} parent=47 // pred_fallthru
          _
        %s379 = sand.u32 %s54, 1
        %s380 = scalar_lea.sflag [#allocation3], %s379
        %s381 = sand.u32 %s54, 1
        %s382 = smul.addr %s381, 8
        %s383 = scalar_lea.vmem [#allocation2], %s382
        %p384 = pneg %p67
        %p385 = pneg %p64
        %s386 = sand.u32 %s32, 1
        %s387 = scalar_lea.sflag [#allocation6], %s386
        %s388 = sand.u32 %s80, 1
        %s389 = smul.addr %s388, 8
        %s390 = scalar_lea.vmem [#allocation5], %s389
        %p391 = pneg %p93
        %p392 = pneg %p90
        %s393 = sand.u32 %s32, 1
        %s394 = scalar_lea.sflag [#allocation6], %s393
        %s395 = sand.u32 %s106, 1
        %s396 = smul.addr %s395, 8
        %s397 = scalar_lea.vmem [#allocation7], %s396
        %p398 = pneg %p119
        %p399 = pneg %p116
        %p400 = pneg %p140
        %p401 = pneg %p137
        %p402 = pneg %p161
        %p403 = pneg %p158
        %p404 = pneg %p182
        %p405 = pneg %p179
        %p406 = pneg %p203
        %p407 = pneg %p200
        %p408 = pneg %p231
        %p409 = pneg %p228
        %s410 = sand.u32 %s218, 1
        %s411 = scalar_lea.sflag [#allocation4], %s410
        %s412 = sand.u32 %s218, 1
        %s413 = smul.addr %s412, 8
        %s414 = scalar_lea.vmem [#allocation8], %s413
        %p415 = pneg %p259
        %p416 = pneg %p256
        %s417 = sand.u32 %s246, 1
        %s418 = scalar_lea.sflag [#allocation10], %s417
        %s419 = sand.u32 %s246, 1
        %s420 = smul.addr %s419, 32
        %s421 = scalar_lea.vmem [#allocation9], %s420
        %v422 = vld [vmem:[%s356] sm:$0xff]
        %v423 = vld [vmem:[%s365] sm:$0xff]
        %v424 = vld [vmem:[%s374] sm:$0xff]
        %v425 = vld [vmem:[%s3] sm:$0xff]
        %v426 = vld [vmem:[%s3 + $0x8] sm:$0xff]
        %v427 = vld [vmem:[%s3 + $0x10] sm:$0xff]
        %v428 = vld [vmem:[%s3 + $0x18] sm:$0xff]
        %vm429 = vcmask 261120
        %v431 = vsel %vm429, %v422, 0
        %433 = vmatprep.subr.mxu0 0.0
        %434 = vmatpush1.msra.mxu0 %v425
        %435 = vmatprep.subr.mxu0 0.0
        %436 = vmatpush1.msra.mxu0 %v426
        %437 = vmatprep.subr.mxu0 0.0
        %438 = vmatpush1.msra.mxu0 %v427
        %439 = vmatprep.subr.mxu0 0.0
        %440 = vmatpush1.msra.mxu0 %v428
        %441 = vmatprep.subr.mxu0 0.0
        %442 = vmatpush1.msra.mxu0 0.0
        %443 = vmatprep.subr.mxu0 0.0
        %444 = vmatpush1.msra.mxu0 0.0
        %445 = vmatprep.subr.mxu0 0.0
        %446 = vmatpush1.msra.mxu0 0.0
        %447 = vmatprep.subr.mxu0 0.0
        %448 = vmatpush1.msra.mxu0 0.0
        %449 = vmatprep.subr.mxu0 0.0
        %450 = vmatpush1.msra.mxu0 0.0
        %451 = vmatprep.subr.mxu0 0.0
        %452 = vmatpush1.msra.mxu0 0.0
        %453 = vmatprep.subr.mxu0 0.0
        %454 = vmatpush1.msra.mxu0 0.0
        %455 = vmatprep.subr.mxu0 0.0
        %456 = vmatpush1.msra.mxu0 0.0
        %457 = vmatprep.subr.mxu0 0.0
        %458 = vmatpush1.msra.mxu0 0.0
        %459 = vmatprep.subr.mxu0 0.0
        %460 = vmatpush1.msra.mxu0 0.0
        %461 = vmatprep.subr.mxu0 0.0
        %462 = vmatpush1.msra.mxu0 0.0
        %463 = vmatprep.subr.mxu0 0.0
        %464 = vmatpush1.msra.mxu0 0.0
        %465 = vmatprep.subr.mxu0 0.0
        %466 = vmatpush1.msra.mxu0 0.0
        %467 = vmatprep.subr.mxu0 0.0
        %468 = vmatpush1.msra.mxu0 0.0
        %469 = vmatprep.subr.mxu0 0.0
        %470 = vmatpush1.msra.mxu0 0.0
        %471 = vmatprep.subr.mxu0 0.0
        %472 = vmatpush1.msra.mxu0 0.0
        %473 = vmatprep.subr.mxu0 0.0
        %474 = vmatpush1.msra.mxu0 0.0
        %475 = vmatprep.subr.mxu0 0.0
        %476 = vmatpush1.msra.mxu0 0.0
        %477 = vmatprep.subr.mxu0 0.0
        %478 = vmatpush1.msra.mxu0 0.0
        %479 = vmatprep.subr.mxu0 0.0
        %480 = vmatpush1.msra.mxu0 0.0
        %481 = vmatprep.subr.mxu0 0.0
        %482 = vmatpush1.msra.mxu0 0.0
        %483 = vmatprep.subr.mxu0 0.0
        %484 = vmatpush1.msra.mxu0 0.0
        %485 = vmatprep.subr.mxu0 0.0
        %486 = vmatpush1.msra.mxu0 0.0
        %487 = vmatprep.subr.mxu0 0.0
        %488 = vmatpush1.msra.mxu0 0.0
        %489 = vmatprep.subr.mxu0 0.0
        %490 = vmatpush1.msra.mxu0 0.0
        %491 = vmatprep.subr.mxu0 0.0
        %492 = vmatpush1.msra.mxu0 0.0
        %493 = vmatprep.subr.mxu0 0.0
        %494 = vmatpush1.msra.mxu0 0.0
        %495 = vmatprep.subr.mxu0 0.0
        %496 = vmatpush1.msra.mxu0 0.0
        %497 = vmatprep.mubr.f32.mxu0 0.0
        %498 = vmatmul.mubr.f32.gmra.mrb[0].mxu0 %v431
        %v499 = vpop.f32.mrb[0].mxu0
        %v500 = vadd.f32 0.0, %v499
        %v501 = vpop.f32.mrb[0].mxu0
        %502 = vdwg.mxu0
        %v503 = vld [vmem:[%s4] sm:$0xff]
        %v504 = vld [vmem:[%s4 + $0x8] sm:$0xff]
        %v505 = vld [vmem:[%s4 + $0x10] sm:$0xff]
        %v506 = vld [vmem:[%s4 + $0x18] sm:$0xff]
        %v508 = vsel %vm429, %v423, 0
        %510 = vmatprep.subr.mxu0 0.0
        %511 = vmatpush1.msra.mxu0 %v503
        %512 = vmatprep.subr.mxu0 0.0
        %513 = vmatpush1.msra.mxu0 %v504
        %514 = vmatprep.subr.mxu0 0.0
        %515 = vmatpush1.msra.mxu0 %v505
        %516 = vmatprep.subr.mxu0 0.0
        %517 = vmatpush1.msra.mxu0 %v506
        %518 = vmatprep.subr.mxu0 0.0
        %519 = vmatpush1.msra.mxu0 0.0
        %520 = vmatprep.subr.mxu0 0.0
        %521 = vmatpush1.msra.mxu0 0.0
        %522 = vmatprep.subr.mxu0 0.0
        %523 = vmatpush1.msra.mxu0 0.0
        %524 = vmatprep.subr.mxu0 0.0
        %525 = vmatpush1.msra.mxu0 0.0
        %526 = vmatprep.subr.mxu0 0.0
        %527 = vmatpush1.msra.mxu0 0.0
        %528 = vmatprep.subr.mxu0 0.0
        %529 = vmatpush1.msra.mxu0 0.0
        %530 = vmatprep.subr.mxu0 0.0
        %531 = vmatpush1.msra.mxu0 0.0
        %532 = vmatprep.subr.mxu0 0.0
        %533 = vmatpush1.msra.mxu0 0.0
        %534 = vmatprep.subr.mxu0 0.0
        %535 = vmatpush1.msra.mxu0 0.0
        %536 = vmatprep.subr.mxu0 0.0
        %537 = vmatpush1.msra.mxu0 0.0
        %538 = vmatprep.subr.mxu0 0.0
        %539 = vmatpush1.msra.mxu0 0.0
        %540 = vmatprep.subr.mxu0 0.0
        %541 = vmatpush1.msra.mxu0 0.0
        %542 = vmatprep.subr.mxu0 0.0
        %543 = vmatpush1.msra.mxu0 0.0
        %544 = vmatprep.subr.mxu0 0.0
        %545 = vmatpush1.msra.mxu0 0.0
        %546 = vmatprep.subr.mxu0 0.0
        %547 = vmatpush1.msra.mxu0 0.0
        %548 = vmatprep.subr.mxu0 0.0
        %549 = vmatpush1.msra.mxu0 0.0
        %550 = vmatprep.subr.mxu0 0.0
        %551 = vmatpush1.msra.mxu0 0.0
        %552 = vmatprep.subr.mxu0 0.0
        %553 = vmatpush1.msra.mxu0 0.0
        %554 = vmatprep.subr.mxu0 0.0
        %555 = vmatpush1.msra.mxu0 0.0
        %556 = vmatprep.subr.mxu0 0.0
        %557 = vmatpush1.msra.mxu0 0.0
        %558 = vmatprep.subr.mxu0 0.0
        %559 = vmatpush1.msra.mxu0 0.0
        %560 = vmatprep.subr.mxu0 0.0
        %561 = vmatpush1.msra.mxu0 0.0
        %562 = vmatprep.subr.mxu0 0.0
        %563 = vmatpush1.msra.mxu0 0.0
        %564 = vmatprep.subr.mxu0 0.0
        %565 = vmatpush1.msra.mxu0 0.0
        %566 = vmatprep.subr.mxu0 0.0
        %567 = vmatpush1.msra.mxu0 0.0
        %568 = vmatprep.subr.mxu0 0.0
        %569 = vmatpush1.msra.mxu0 0.0
        %570 = vmatprep.subr.mxu0 0.0
        %571 = vmatpush1.msra.mxu0 0.0
        %572 = vmatprep.subr.mxu0 0.0
        %573 = vmatpush1.msra.mxu0 0.0
        %574 = vmatprep.mubr.f32.mxu0 0.0
        %575 = vmatmul.mubr.f32.gmra.mrb[0].mxu0 %v508
        %v576 = vpop.f32.mrb[0].mxu0
        %v577 = vadd.f32 0.0, %v576
        %v578 = vpop.f32.mrb[0].mxu0
        %579 = vdwg.mxu0
        %v580 = vld [vmem:[%s5] sm:$0xff]
        %v581 = vld [vmem:[%s5 + $0x8] sm:$0xff]
        %v582 = vld [vmem:[%s5 + $0x10] sm:$0xff]
        %v583 = vld [vmem:[%s5 + $0x18] sm:$0xff]
        %v585 = vsel %vm429, %v424, 0
        %587 = vmatprep.subr.mxu0 0.0
        %588 = vmatpush1.msra.mxu0 %v580
        %589 = vmatprep.subr.mxu0 0.0
        %590 = vmatpush1.msra.mxu0 %v581
        %591 = vmatprep.subr.mxu0 0.0
        %592 = vmatpush1.msra.mxu0 %v582
        %593 = vmatprep.subr.mxu0 0.0
        %594 = vmatpush1.msra.mxu0 %v583
        %595 = vmatprep.subr.mxu0 0.0
        %596 = vmatpush1.msra.mxu0 0.0
        %597 = vmatprep.subr.mxu0 0.0
        %598 = vmatpush1.msra.mxu0 0.0
        %599 = vmatprep.subr.mxu0 0.0
        %600 = vmatpush1.msra.mxu0 0.0
        %601 = vmatprep.subr.mxu0 0.0
        %602 = vmatpush1.msra.mxu0 0.0
        %603 = vmatprep.subr.mxu0 0.0
        %604 = vmatpush1.msra.mxu0 0.0
        %605 = vmatprep.subr.mxu0 0.0
        %606 = vmatpush1.msra.mxu0 0.0
        %607 = vmatprep.subr.mxu0 0.0
        %608 = vmatpush1.msra.mxu0 0.0
        %609 = vmatprep.subr.mxu0 0.0
        %610 = vmatpush1.msra.mxu0 0.0
        %611 = vmatprep.subr.mxu0 0.0
        %612 = vmatpush1.msra.mxu0 0.0
        %613 = vmatprep.subr.mxu0 0.0
        %614 = vmatpush1.msra.mxu0 0.0
        %615 = vmatprep.subr.mxu0 0.0
        %616 = vmatpush1.msra.mxu0 0.0
        %617 = vmatprep.subr.mxu0 0.0
        %618 = vmatpush1.msra.mxu0 0.0
        %619 = vmatprep.subr.mxu0 0.0
        %620 = vmatpush1.msra.mxu0 0.0
        %621 = vmatprep.subr.mxu0 0.0
        %622 = vmatpush1.msra.mxu0 0.0
        %623 = vmatprep.subr.mxu0 0.0
        %624 = vmatpush1.msra.mxu0 0.0
        %625 = vmatprep.subr.mxu0 0.0
        %626 = vmatpush1.msra.mxu0 0.0
        %627 = vmatprep.subr.mxu0 0.0
        %628 = vmatpush1.msra.mxu0 0.0
        %629 = vmatprep.subr.mxu0 0.0
        %630 = vmatpush1.msra.mxu0 0.0
        %631 = vmatprep.subr.mxu0 0.0
        %632 = vmatpush1.msra.mxu0 0.0
        %633 = vmatprep.subr.mxu0 0.0
        %634 = vmatpush1.msra.mxu0 0.0
        %635 = vmatprep.subr.mxu0 0.0
        %636 = vmatpush1.msra.mxu0 0.0
        %637 = vmatprep.subr.mxu0 0.0
        %638 = vmatpush1.msra.mxu0 0.0
        %639 = vmatprep.subr.mxu0 0.0
        %640 = vmatpush1.msra.mxu0 0.0
        %641 = vmatprep.subr.mxu0 0.0
        %642 = vmatpush1.msra.mxu0 0.0
        %643 = vmatprep.subr.mxu0 0.0
        %644 = vmatpush1.msra.mxu0 0.0
        %645 = vmatprep.subr.mxu0 0.0
        %646 = vmatpush1.msra.mxu0 0.0
        %647 = vmatprep.subr.mxu0 0.0
        %648 = vmatpush1.msra.mxu0 0.0
        %649 = vmatprep.subr.mxu0 0.0
        %650 = vmatpush1.msra.mxu0 0.0
        %651 = vmatprep.mubr.f32.mxu0 0.0
        %652 = vmatmul.mubr.f32.gmra.mrb[0].mxu0 %v585
        %v653 = vpop.f32.mrb[0].mxu0
        %v654 = vadd.f32 0.0, %v653
        %v655 = vpop.f32.mrb[0].mxu0
        %656 = vdwg.mxu0
        %vm657 = vcmask 130048
        %v659 = vsel %vm657, %v500, 0
        %v662 = vsel %vm657, %v577, 0
        %664 = vmatprep.subr.mxu0 0.0
        %665 = vmatpush1.xpose.msra.mxu0 %v662
        %666 = vmatprep.subr.mxu0 0.0
        %667 = vmatpush1.xpose.msra.mxu0 0.0
        %668 = vmatprep.subr.mxu0 0.0
        %669 = vmatpush1.xpose.msra.mxu0 0.0
        %670 = vmatprep.subr.mxu0 0.0
        %671 = vmatpush1.xpose.msra.mxu0 0.0
        %672 = vmatprep.subr.mxu0 0.0
        %673 = vmatpush1.xpose.msra.mxu0 0.0
        %674 = vmatprep.subr.mxu0 0.0
        %675 = vmatpush1.xpose.msra.mxu0 0.0
        %676 = vmatprep.subr.mxu0 0.0
        %677 = vmatpush1.xpose.msra.mxu0 0.0
        %678 = vmatprep.subr.mxu0 0.0
        %679 = vmatpush1.xpose.msra.mxu0 0.0
        %680 = vmatprep.subr.mxu0 0.0
        %681 = vmatpush1.xpose.msra.mxu0 0.0
        %682 = vmatprep.subr.mxu0 0.0
        %683 = vmatpush1.xpose.msra.mxu0 0.0
        %684 = vmatprep.subr.mxu0 0.0
        %685 = vmatpush1.xpose.msra.mxu0 0.0
        %686 = vmatprep.subr.mxu0 0.0
        %687 = vmatpush1.xpose.msra.mxu0 0.0
        %688 = vmatprep.subr.mxu0 0.0
        %689 = vmatpush1.xpose.msra.mxu0 0.0
        %690 = vmatprep.subr.mxu0 0.0
        %691 = vmatpush1.xpose.msra.mxu0 0.0
        %692 = vmatprep.subr.mxu0 0.0
        %693 = vmatpush1.xpose.msra.mxu0 0.0
        %694 = vmatprep.subr.mxu0 0.0
        %695 = vmatpush1.xpose.msra.mxu0 0.0
        %696 = vmatprep.subr.mxu0 0.0
        %697 = vmatpush1.xpose.msra.mxu0 0.0
        %698 = vmatprep.subr.mxu0 0.0
        %699 = vmatpush1.xpose.msra.mxu0 0.0
        %700 = vmatprep.subr.mxu0 0.0
        %701 = vmatpush1.xpose.msra.mxu0 0.0
        %702 = vmatprep.subr.mxu0 0.0
        %703 = vmatpush1.xpose.msra.mxu0 0.0
        %704 = vmatprep.subr.mxu0 0.0
        %705 = vmatpush1.xpose.msra.mxu0 0.0
        %706 = vmatprep.subr.mxu0 0.0
        %707 = vmatpush1.xpose.msra.mxu0 0.0
        %708 = vmatprep.subr.mxu0 0.0
        %709 = vmatpush1.xpose.msra.mxu0 0.0
        %710 = vmatprep.subr.mxu0 0.0
        %711 = vmatpush1.xpose.msra.mxu0 0.0
        %712 = vmatprep.subr.mxu0 0.0
        %713 = vmatpush1.xpose.msra.mxu0 0.0
        %714 = vmatprep.subr.mxu0 0.0
        %715 = vmatpush1.xpose.msra.mxu0 0.0
        %716 = vmatprep.subr.mxu0 0.0
        %717 = vmatpush1.xpose.msra.mxu0 0.0
        %718 = vmatprep.subr.mxu0 0.0
        %719 = vmatpush1.xpose.msra.mxu0 0.0
        %720 = vmatprep.subr.mxu0 0.0
        %721 = vmatpush1.xpose.msra.mxu0 0.0
        %722 = vmatprep.subr.mxu0 0.0
        %723 = vmatpush1.xpose.msra.mxu0 0.0
        %724 = vmatprep.subr.mxu0 0.0
        %725 = vmatpush1.xpose.msra.mxu0 0.0
        %726 = vmatprep.subr.mxu0 0.0
        %727 = vmatpush1.xpose.msra.mxu0 0.0
        %728 = vmatprep.mubr.f32.mxu0 0.0
        %729 = vmatmul.mubr.f32.gmra.mrb[0].mxu0 %v659
        %v730 = vpop.f32.mrb[0].mxu0
        %v731 = vadd.f32 0.0, %v730
        %v732 = vpop.f32.mrb[0].mxu0
        %733 = vdwg.mxu0
        %vm734 = vcmask 64512
        %v735 = vsel %vm734, %v731, -inf
        %736 = vmax.xlane.f32.xlu0 %v735
        %v737 = vpop.xlane.xlu0 %736
        %v738 = vsub.f32 %v731, %v737
        %v739 = vmul.f32 %v738, 1.442695
        %v740 = vpow.pop %v739
        %v741 = vsel %vm734, %v740, 0.0
        %742 = vadd.xlane.f32.xlu0 %v741
        %v743 = vpop.xlane.xlu0 %742
        %v744 = vrcp.pop %v743
        %v745 = vmul.f32 %v740, %v744
        %746 = vst.msk [vmem:[%s421] sm:$0xff] %vm734, %v745
        %v748 = vsel %vm734, %v745, 0
        %750 = vmatprep.subr.mxu0 0.0
        %751 = vmatpush1.msra.mxu0 %v654
        %752 = vmatprep.subr.mxu0 0.0
        %753 = vmatpush1.msra.mxu0 0.0
        %754 = vmatprep.subr.mxu0 0.0
        %755 = vmatpush1.msra.mxu0 0.0
        %756 = vmatprep.subr.mxu0 0.0
        %757 = vmatpush1.msra.mxu0 0.0
        %758 = vmatprep.subr.mxu0 0.0
        %759 = vmatpush1.msra.mxu0 0.0
        %760 = vmatprep.subr.mxu0 0.0
        %761 = vmatpush1.msra.mxu0 0.0
        %762 = vmatprep.subr.mxu0 0.0
        %763 = vmatpush1.msra.mxu0 0.0
        %764 = vmatprep.subr.mxu0 0.0
        %765 = vmatpush1.msra.mxu0 0.0
        %766 = vmatprep.subr.mxu0 0.0
        %767 = vmatpush1.msra.mxu0 0.0
        %768 = vmatprep.subr.mxu0 0.0
        %769 = vmatpush1.msra.mxu0 0.0
        %770 = vmatprep.subr.mxu0 0.0
        %771 = vmatpush1.msra.mxu0 0.0
        %772 = vmatprep.subr.mxu0 0.0
        %773 = vmatpush1.msra.mxu0 0.0
        %774 = vmatprep.subr.mxu0 0.0
        %775 = vmatpush1.msra.mxu0 0.0
        %776 = vmatprep.subr.mxu0 0.0
        %777 = vmatpush1.msra.mxu0 0.0
        %778 = vmatprep.subr.mxu0 0.0
        %779 = vmatpush1.msra.mxu0 0.0
        %780 = vmatprep.subr.mxu0 0.0
        %781 = vmatpush1.msra.mxu0 0.0
        %782 = vmatprep.subr.mxu0 0.0
        %783 = vmatpush1.msra.mxu0 0.0
        %784 = vmatprep.subr.mxu0 0.0
        %785 = vmatpush1.msra.mxu0 0.0
        %786 = vmatprep.subr.mxu0 0.0
        %787 = vmatpush1.msra.mxu0 0.0
        %788 = vmatprep.subr.mxu0 0.0
        %789 = vmatpush1.msra.mxu0 0.0
        %790 = vmatprep.subr.mxu0 0.0
        %791 = vmatpush1.msra.mxu0 0.0
        %792 = vmatprep.subr.mxu0 0.0
        %793 = vmatpush1.msra.mxu0 0.0
        %794 = vmatprep.subr.mxu0 0.0
        %795 = vmatpush1.msra.mxu0 0.0
        %796 = vmatprep.subr.mxu0 0.0
        %797 = vmatpush1.msra.mxu0 0.0
        %798 = vmatprep.subr.mxu0 0.0
        %799 = vmatpush1.msra.mxu0 0.0
        %800 = vmatprep.subr.mxu0 0.0
        %801 = vmatpush1.msra.mxu0 0.0
        %802 = vmatprep.subr.mxu0 0.0
        %803 = vmatpush1.msra.mxu0 0.0
        %804 = vmatprep.subr.mxu0 0.0
        %805 = vmatpush1.msra.mxu0 0.0
        %806 = vmatprep.subr.mxu0 0.0
        %807 = vmatpush1.msra.mxu0 0.0
        %808 = vmatprep.subr.mxu0 0.0
        %809 = vmatpush1.msra.mxu0 0.0
        %810 = vmatprep.subr.mxu0 0.0
        %811 = vmatpush1.msra.mxu0 0.0
        %812 = vmatprep.subr.mxu0 0.0
        %813 = vmatpush1.msra.mxu0 0.0
        %814 = vmatprep.mubr.f32.mxu0 0.0
        %815 = vmatmul.mubr.f32.gmra.mrb[0].mxu0 %v748
        %v816 = vpop.f32.mrb[0].mxu0
        %v817 = vadd.f32 0.0, %v816
        %v818 = vpop.f32.mrb[0].mxu0
        %819 = vdwg.mxu0
        %820 = vrot.lane.b32.xlu0 %v500, 112
        %v821 = vpop.permute.xlu0 %820
        %822 = vrot.lane.b32.xlu0 %v577, 112
        %v823 = vpop.permute.xlu0 %822
        %v824 = vsel %vm657, %v821, 0
        %v826 = vsel %vm657, %v823, 0
        %828 = vmatprep.subr.mxu0 0.0
        %829 = vmatpush1.xpose.msra.mxu0 %v826
        %830 = vmatprep.subr.mxu0 0.0
        %831 = vmatpush1.xpose.msra.mxu0 0.0
        %832 = vmatprep.subr.mxu0 0.0
        %833 = vmatpush1.xpose.msra.mxu0 0.0
        %834 = vmatprep.subr.mxu0 0.0
        %835 = vmatpush1.xpose.msra.mxu0 0.0
        %836 = vmatprep.subr.mxu0 0.0
        %837 = vmatpush1.xpose.msra.mxu0 0.0
        %838 = vmatprep.subr.mxu0 0.0
        %839 = vmatpush1.xpose.msra.mxu0 0.0
        %840 = vmatprep.subr.mxu0 0.0
        %841 = vmatpush1.xpose.msra.mxu0 0.0
        %842 = vmatprep.subr.mxu0 0.0
        %843 = vmatpush1.xpose.msra.mxu0 0.0
        %844 = vmatprep.subr.mxu0 0.0
        %845 = vmatpush1.xpose.msra.mxu0 0.0
        %846 = vmatprep.subr.mxu0 0.0
        %847 = vmatpush1.xpose.msra.mxu0 0.0
        %848 = vmatprep.subr.mxu0 0.0
        %849 = vmatpush1.xpose.msra.mxu0 0.0
        %850 = vmatprep.subr.mxu0 0.0
        %851 = vmatpush1.xpose.msra.mxu0 0.0
        %852 = vmatprep.subr.mxu0 0.0
        %853 = vmatpush1.xpose.msra.mxu0 0.0
        %854 = vmatprep.subr.mxu0 0.0
        %855 = vmatpush1.xpose.msra.mxu0 0.0
        %856 = vmatprep.subr.mxu0 0.0
        %857 = vmatpush1.xpose.msra.mxu0 0.0
        %858 = vmatprep.subr.mxu0 0.0
        %859 = vmatpush1.xpose.msra.mxu0 0.0
        %860 = vmatprep.subr.mxu0 0.0
        %861 = vmatpush1.xpose.msra.mxu0 0.0
        %862 = vmatprep.subr.mxu0 0.0
        %863 = vmatpush1.xpose.msra.mxu0 0.0
        %864 = vmatprep.subr.mxu0 0.0
        %865 = vmatpush1.xpose.msra.mxu0 0.0
        %866 = vmatprep.subr.mxu0 0.0
        %867 = vmatpush1.xpose.msra.mxu0 0.0
        %868 = vmatprep.subr.mxu0 0.0
        %869 = vmatpush1.xpose.msra.mxu0 0.0
        %870 = vmatprep.subr.mxu0 0.0
        %871 = vmatpush1.xpose.msra.mxu0 0.0
        %872 = vmatprep.subr.mxu0 0.0
        %873 = vmatpush1.xpose.msra.mxu0 0.0
        %874 = vmatprep.subr.mxu0 0.0
        %875 = vmatpush1.xpose.msra.mxu0 0.0
        %876 = vmatprep.subr.mxu0 0.0
        %877 = vmatpush1.xpose.msra.mxu0 0.0
        %878 = vmatprep.subr.mxu0 0.0
        %879 = vmatpush1.xpose.msra.mxu0 0.0
        %880 = vmatprep.subr.mxu0 0.0
        %881 = vmatpush1.xpose.msra.mxu0 0.0
        %882 = vmatprep.subr.mxu0 0.0
        %883 = vmatpush1.xpose.msra.mxu0 0.0
        %884 = vmatprep.subr.mxu0 0.0
        %885 = vmatpush1.xpose.msra.mxu0 0.0
        %886 = vmatprep.subr.mxu0 0.0
        %887 = vmatpush1.xpose.msra.mxu0 0.0
        %888 = vmatprep.subr.mxu0 0.0
        %889 = vmatpush1.xpose.msra.mxu0 0.0
        %890 = vmatprep.subr.mxu0 0.0
        %891 = vmatpush1.xpose.msra.mxu0 0.0
        %892 = vmatprep.mubr.f32.mxu0 0.0
        %893 = vmatmul.mubr.f32.gmra.mrb[0].mxu0 %v824
        %v894 = vpop.f32.mrb[0].mxu0
        %v895 = vadd.f32 0.0, %v894
        %v896 = vpop.f32.mrb[0].mxu0
        %897 = vdwg.mxu0
        %v898 = vsel %vm734, %v895, -inf
        %899 = vmax.xlane.f32.xlu0 %v898
        %v900 = vpop.xlane.xlu0 %899
        %v901 = vsub.f32 %v895, %v900
        %v902 = vmul.f32 %v901, 1.442695
        %v903 = vpow.pop %v902
        %v904 = vsel %vm734, %v903, 0.0
        %905 = vadd.xlane.f32.xlu0 %v904
        %v906 = vpop.xlane.xlu0 %905
        %v907 = vrcp.pop %v906
        %v908 = vmul.f32 %v903, %v907
        %s909 = scalar_lea.vmem %s421, 8 [#allocation9]
        %910 = vst.msk [vmem:[%s909] sm:$0xff] %vm734, %v908
        %912 = vrot.lane.b32.xlu0 %v654, 112
        %v913 = vpop.permute.xlu0 %912
        %v916 = vsel %vm734, %v908, 0
        %918 = vmatprep.subr.mxu0 0.0
        %919 = vmatpush1.msra.mxu0 %v913
        %920 = vmatprep.subr.mxu0 0.0
        %921 = vmatpush1.msra.mxu0 0.0
        %922 = vmatprep.subr.mxu0 0.0
        %923 = vmatpush1.msra.mxu0 0.0
        %924 = vmatprep.subr.mxu0 0.0
        %925 = vmatpush1.msra.mxu0 0.0
        %926 = vmatprep.subr.mxu0 0.0
        %927 = vmatpush1.msra.mxu0 0.0
        %928 = vmatprep.subr.mxu0 0.0
        %929 = vmatpush1.msra.mxu0 0.0
        %930 = vmatprep.subr.mxu0 0.0
        %931 = vmatpush1.msra.mxu0 0.0
        %932 = vmatprep.subr.mxu0 0.0
        %933 = vmatpush1.msra.mxu0 0.0
        %934 = vmatprep.subr.mxu0 0.0
        %935 = vmatpush1.msra.mxu0 0.0
        %936 = vmatprep.subr.mxu0 0.0
        %937 = vmatpush1.msra.mxu0 0.0
        %938 = vmatprep.subr.mxu0 0.0
        %939 = vmatpush1.msra.mxu0 0.0
        %940 = vmatprep.subr.mxu0 0.0
        %941 = vmatpush1.msra.mxu0 0.0
        %942 = vmatprep.subr.mxu0 0.0
        %943 = vmatpush1.msra.mxu0 0.0
        %944 = vmatprep.subr.mxu0 0.0
        %945 = vmatpush1.msra.mxu0 0.0
        %946 = vmatprep.subr.mxu0 0.0
        %947 = vmatpush1.msra.mxu0 0.0
        %948 = vmatprep.subr.mxu0 0.0
        %949 = vmatpush1.msra.mxu0 0.0
        %950 = vmatprep.subr.mxu0 0.0
        %951 = vmatpush1.msra.mxu0 0.0
        %952 = vmatprep.subr.mxu0 0.0
        %953 = vmatpush1.msra.mxu0 0.0
        %954 = vmatprep.subr.mxu0 0.0
        %955 = vmatpush1.msra.mxu0 0.0
        %956 = vmatprep.subr.mxu0 0.0
        %957 = vmatpush1.msra.mxu0 0.0
        %958 = vmatprep.subr.mxu0 0.0
        %959 = vmatpush1.msra.mxu0 0.0
        %960 = vmatprep.subr.mxu0 0.0
        %961 = vmatpush1.msra.mxu0 0.0
        %962 = vmatprep.subr.mxu0 0.0
        %963 = vmatpush1.msra.mxu0 0.0
        %964 = vmatprep.subr.mxu0 0.0
        %965 = vmatpush1.msra.mxu0 0.0
        %966 = vmatprep.subr.mxu0 0.0
        %967 = vmatpush1.msra.mxu0 0.0
        %968 = vmatprep.subr.mxu0 0.0
        %969 = vmatpush1.msra.mxu0 0.0
        %970 = vmatprep.subr.mxu0 0.0
        %971 = vmatpush1.msra.mxu0 0.0
        %972 = vmatprep.subr.mxu0 0.0
        %973 = vmatpush1.msra.mxu0 0.0
        %974 = vmatprep.subr.mxu0 0.0
        %975 = vmatpush1.msra.mxu0 0.0
        %976 = vmatprep.subr.mxu0 0.0
        %977 = vmatpush1.msra.mxu0 0.0
        %978 = vmatprep.subr.mxu0 0.0
        %979 = vmatpush1.msra.mxu0 0.0
        %980 = vmatprep.subr.mxu0 0.0
        %981 = vmatpush1.msra.mxu0 0.0
        %982 = vmatprep.mubr.f32.mxu0 0.0
        %983 = vmatmul.mubr.f32.gmra.mrb[0].mxu0 %v916
        %v984 = vpop.f32.mrb[0].mxu0
        %v985 = vadd.f32 0.0, %v984
        %v986 = vpop.f32.mrb[0].mxu0
        %987 = vdwg.mxu0
        %988 = vrot.lane.b32.xlu0 %v500, 96
        %v989 = vpop.permute.xlu0 %988
        %990 = vrot.lane.b32.xlu0 %v577, 96
        %v991 = vpop.permute.xlu0 %990
        %v992 = vsel %vm657, %v989, 0
        %v994 = vsel %vm657, %v991, 0
        %996 = vmatprep.subr.mxu0 0.0
        %997 = vmatpush1.xpose.msra.mxu0 %v994
        %998 = vmatprep.subr.mxu0 0.0
        %999 = vmatpush1.xpose.msra.mxu0 0.0
        %1000 = vmatprep.subr.mxu0 0.0
        %1001 = vmatpush1.xpose.msra.mxu0 0.0
        %1002 = vmatprep.subr.mxu0 0.0
        %1003 = vmatpush1.xpose.msra.mxu0 0.0
        %1004 = vmatprep.subr.mxu0 0.0
        %1005 = vmatpush1.xpose.msra.mxu0 0.0
        %1006 = vmatprep.subr.mxu0 0.0
        %1007 = vmatpush1.xpose.msra.mxu0 0.0
        %1008 = vmatprep.subr.mxu0 0.0
        %1009 = vmatpush1.xpose.msra.mxu0 0.0
        %1010 = vmatprep.subr.mxu0 0.0
        %1011 = vmatpush1.xpose.msra.mxu0 0.0
        %1012 = vmatprep.subr.mxu0 0.0
        %1013 = vmatpush1.xpose.msra.mxu0 0.0
        %1014 = vmatprep.subr.mxu0 0.0
        %1015 = vmatpush1.xpose.msra.mxu0 0.0
        %1016 = vmatprep.subr.mxu0 0.0
        %1017 = vmatpush1.xpose.msra.mxu0 0.0
        %1018 = vmatprep.subr.mxu0 0.0
        %1019 = vmatpush1.xpose.msra.mxu0 0.0
        %1020 = vmatprep.subr.mxu0 0.0
        %1021 = vmatpush1.xpose.msra.mxu0 0.0
        %1022 = vmatprep.subr.mxu0 0.0
        %1023 = vmatpush1.xpose.msra.mxu0 0.0
        %1024 = vmatprep.subr.mxu0 0.0
        %1025 = vmatpush1.xpose.msra.mxu0 0.0
        %1026 = vmatprep.subr.mxu0 0.0
        %1027 = vmatpush1.xpose.msra.mxu0 0.0
        %1028 = vmatprep.subr.mxu0 0.0
        %1029 = vmatpush1.xpose.msra.mxu0 0.0
        %1030 = vmatprep.subr.mxu0 0.0
        %1031 = vmatpush1.xpose.msra.mxu0 0.0
        %1032 = vmatprep.subr.mxu0 0.0
        %1033 = vmatpush1.xpose.msra.mxu0 0.0
        %1034 = vmatprep.subr.mxu0 0.0
        %1035 = vmatpush1.xpose.msra.mxu0 0.0
        %1036 = vmatprep.subr.mxu0 0.0
        %1037 = vmatpush1.xpose.msra.mxu0 0.0
        %1038 = vmatprep.subr.mxu0 0.0
        %1039 = vmatpush1.xpose.msra.mxu0 0.0
        %1040 = vmatprep.subr.mxu0 0.0
        %1041 = vmatpush1.xpose.msra.mxu0 0.0
        %1042 = vmatprep.subr.mxu0 0.0
        %1043 = vmatpush1.xpose.msra.mxu0 0.0
        %1044 = vmatprep.subr.mxu0 0.0
        %1045 = vmatpush1.xpose.msra.mxu0 0.0
        %1046 = vmatprep.subr.mxu0 0.0
        %1047 = vmatpush1.xpose.msra.mxu0 0.0
        %1048 = vmatprep.subr.mxu0 0.0
        %1049 = vmatpush1.xpose.msra.mxu0 0.0
        %1050 = vmatprep.subr.mxu0 0.0
        %1051 = vmatpush1.xpose.msra.mxu0 0.0
        %1052 = vmatprep.subr.mxu0 0.0
        %1053 = vmatpush1.xpose.msra.mxu0 0.0
        %1054 = vmatprep.subr.mxu0 0.0
        %1055 = vmatpush1.xpose.msra.mxu0 0.0
        %1056 = vmatprep.subr.mxu0 0.0
        %1057 = vmatpush1.xpose.msra.mxu0 0.0
        %1058 = vmatprep.subr.mxu0 0.0
        %1059 = vmatpush1.xpose.msra.mxu0 0.0
        %1060 = vmatprep.mubr.f32.mxu0 0.0
        %1061 = vmatmul.mubr.f32.gmra.mrb[0].mxu0 %v992
        %v1062 = vpop.f32.mrb[0].mxu0
        %v1063 = vadd.f32 0.0, %v1062
        %v1064 = vpop.f32.mrb[0].mxu0
        %1065 = vdwg.mxu0
        %v1066 = vsel %vm734, %v1063, -inf
        %1067 = vmax.xlane.f32.xlu0 %v1066
        %v1068 = vpop.xlane.xlu0 %1067
        %v1069 = vsub.f32 %v1063, %v1068
        %v1070 = vmul.f32 %v1069, 1.442695
        %v1071 = vpow.pop %v1070
        %v1072 = vsel %vm734, %v1071, 0.0
        %1073 = vadd.xlane.f32.xlu0 %v1072
        %v1074 = vpop.xlane.xlu0 %1073
        %v1075 = vrcp.pop %v1074
        %v1076 = vmul.f32 %v1071, %v1075
        %s1077 = scalar_lea.vmem %s421, 16 [#allocation9]
        %1078 = vst.msk [vmem:[%s1077] sm:$0xff] %vm734, %v1076
        %1079 = vrot.lane.b32.xlu0 %v654, 96
        %v1080 = vpop.permute.xlu0 %1079
        %v1083 = vsel %vm734, %v1076, 0
        %1085 = vmatprep.subr.mxu0 0.0
        %1086 = vmatpush1.msra.mxu0 %v1080
        %1087 = vmatprep.subr.mxu0 0.0
        %1088 = vmatpush1.msra.mxu0 0.0
        %1089 = vmatprep.subr.mxu0 0.0
        %1090 = vmatpush1.msra.mxu0 0.0
        %1091 = vmatprep.subr.mxu0 0.0
        %1092 = vmatpush1.msra.mxu0 0.0
        %1093 = vmatprep.subr.mxu0 0.0
        %1094 = vmatpush1.msra.mxu0 0.0
        %1095 = vmatprep.subr.mxu0 0.0
        %1096 = vmatpush1.msra.mxu0 0.0
        %1097 = vmatprep.subr.mxu0 0.0
        %1098 = vmatpush1.msra.mxu0 0.0
        %1099 = vmatprep.subr.mxu0 0.0
        %1100 = vmatpush1.msra.mxu0 0.0
        %1101 = vmatprep.subr.mxu0 0.0
        %1102 = vmatpush1.msra.mxu0 0.0
        %1103 = vmatprep.subr.mxu0 0.0
        %1104 = vmatpush1.msra.mxu0 0.0
        %1105 = vmatprep.subr.mxu0 0.0
        %1106 = vmatpush1.msra.mxu0 0.0
        %1107 = vmatprep.subr.mxu0 0.0
        %1108 = vmatpush1.msra.mxu0 0.0
        %1109 = vmatprep.subr.mxu0 0.0
        %1110 = vmatpush1.msra.mxu0 0.0
        %1111 = vmatprep.subr.mxu0 0.0
        %1112 = vmatpush1.msra.mxu0 0.0
        %1113 = vmatprep.subr.mxu0 0.0
        %1114 = vmatpush1.msra.mxu0 0.0
        %1115 = vmatprep.subr.mxu0 0.0
        %1116 = vmatpush1.msra.mxu0 0.0
        %1117 = vmatprep.subr.mxu0 0.0
        %1118 = vmatpush1.msra.mxu0 0.0
        %1119 = vmatprep.subr.mxu0 0.0
        %1120 = vmatpush1.msra.mxu0 0.0
        %1121 = vmatprep.subr.mxu0 0.0
        %1122 = vmatpush1.msra.mxu0 0.0
        %1123 = vmatprep.subr.mxu0 0.0
        %1124 = vmatpush1.msra.mxu0 0.0
        %1125 = vmatprep.subr.mxu0 0.0
        %1126 = vmatpush1.msra.mxu0 0.0
        %1127 = vmatprep.subr.mxu0 0.0
        %1128 = vmatpush1.msra.mxu0 0.0
        %1129 = vmatprep.subr.mxu0 0.0
        %1130 = vmatpush1.msra.mxu0 0.0
        %1131 = vmatprep.subr.mxu0 0.0
        %1132 = vmatpush1.msra.mxu0 0.0
        %1133 = vmatprep.subr.mxu0 0.0
        %1134 = vmatpush1.msra.mxu0 0.0
        %1135 = vmatprep.subr.mxu0 0.0
        %1136 = vmatpush1.msra.mxu0 0.0
        %1137 = vmatprep.subr.mxu0 0.0
        %1138 = vmatpush1.msra.mxu0 0.0
        %1139 = vmatprep.subr.mxu0 0.0
        %1140 = vmatpush1.msra.mxu0 0.0
        %1141 = vmatprep.subr.mxu0 0.0
        %1142 = vmatpush1.msra.mxu0 0.0
        %1143 = vmatprep.subr.mxu0 0.0
        %1144 = vmatpush1.msra.mxu0 0.0
        %1145 = vmatprep.subr.mxu0 0.0
        %1146 = vmatpush1.msra.mxu0 0.0
        %1147 = vmatprep.subr.mxu0 0.0
        %1148 = vmatpush1.msra.mxu0 0.0
        %1149 = vmatprep.mubr.f32.mxu0 0.0
        %1150 = vmatmul.mubr.f32.gmra.mrb[0].mxu0 %v1083
        %v1151 = vpop.f32.mrb[0].mxu0
        %v1152 = vadd.f32 0.0, %v1151
        %v1153 = vpop.f32.mrb[0].mxu0
        %1154 = vdwg.mxu0
        %1155 = vrot.lane.b32.xlu0 %v500, 80
        %v1156 = vpop.permute.xlu0 %1155
        %1157 = vrot.lane.b32.xlu0 %v577, 80
        %v1158 = vpop.permute.xlu0 %1157
        %v1159 = vsel %vm657, %v1156, 0
        %v1161 = vsel %vm657, %v1158, 0
        %1163 = vmatprep.subr.mxu0 0.0
        %1164 = vmatpush1.xpose.msra.mxu0 %v1161
        %1165 = vmatprep.subr.mxu0 0.0
        %1166 = vmatpush1.xpose.msra.mxu0 0.0
        %1167 = vmatprep.subr.mxu0 0.0
        %1168 = vmatpush1.xpose.msra.mxu0 0.0
        %1169 = vmatprep.subr.mxu0 0.0
        %1170 = vmatpush1.xpose.msra.mxu0 0.0
        %1171 = vmatprep.subr.mxu0 0.0
        %1172 = vmatpush1.xpose.msra.mxu0 0.0
        %1173 = vmatprep.subr.mxu0 0.0
        %1174 = vmatpush1.xpose.msra.mxu0 0.0
        %1175 = vmatprep.subr.mxu0 0.0
        %1176 = vmatpush1.xpose.msra.mxu0 0.0
        %1177 = vmatprep.subr.mxu0 0.0
        %1178 = vmatpush1.xpose.msra.mxu0 0.0
        %1179 = vmatprep.subr.mxu0 0.0
        %1180 = vmatpush1.xpose.msra.mxu0 0.0
        %1181 = vmatprep.subr.mxu0 0.0
        %1182 = vmatpush1.xpose.msra.mxu0 0.0
        %1183 = vmatprep.subr.mxu0 0.0
        %1184 = vmatpush1.xpose.msra.mxu0 0.0
        %1185 = vmatprep.subr.mxu0 0.0
        %1186 = vmatpush1.xpose.msra.mxu0 0.0
        %1187 = vmatprep.subr.mxu0 0.0
        %1188 = vmatpush1.xpose.msra.mxu0 0.0
        %1189 = vmatprep.subr.mxu0 0.0
        %1190 = vmatpush1.xpose.msra.mxu0 0.0
        %1191 = vmatprep.subr.mxu0 0.0
        %1192 = vmatpush1.xpose.msra.mxu0 0.0
        %1193 = vmatprep.subr.mxu0 0.0
        %1194 = vmatpush1.xpose.msra.mxu0 0.0
        %1195 = vmatprep.subr.mxu0 0.0
        %1196 = vmatpush1.xpose.msra.mxu0 0.0
        %1197 = vmatprep.subr.mxu0 0.0
        %1198 = vmatpush1.xpose.msra.mxu0 0.0
        %1199 = vmatprep.subr.mxu0 0.0
        %1200 = vmatpush1.xpose.msra.mxu0 0.0
        %1201 = vmatprep.subr.mxu0 0.0
        %1202 = vmatpush1.xpose.msra.mxu0 0.0
        %1203 = vmatprep.subr.mxu0 0.0
        %1204 = vmatpush1.xpose.msra.mxu0 0.0
        %1205 = vmatprep.subr.mxu0 0.0
        %1206 = vmatpush1.xpose.msra.mxu0 0.0
        %1207 = vmatprep.subr.mxu0 0.0
        %1208 = vmatpush1.xpose.msra.mxu0 0.0
        %1209 = vmatprep.subr.mxu0 0.0
        %1210 = vmatpush1.xpose.msra.mxu0 0.0
        %1211 = vmatprep.subr.mxu0 0.0
        %1212 = vmatpush1.xpose.msra.mxu0 0.0
        %1213 = vmatprep.subr.mxu0 0.0
        %1214 = vmatpush1.xpose.msra.mxu0 0.0
        %1215 = vmatprep.subr.mxu0 0.0
        %1216 = vmatpush1.xpose.msra.mxu0 0.0
        %1217 = vmatprep.subr.mxu0 0.0
        %1218 = vmatpush1.xpose.msra.mxu0 0.0
        %1219 = vmatprep.subr.mxu0 0.0
        %1220 = vmatpush1.xpose.msra.mxu0 0.0
        %1221 = vmatprep.subr.mxu0 0.0
        %1222 = vmatpush1.xpose.msra.mxu0 0.0
        %1223 = vmatprep.subr.mxu0 0.0
        %1224 = vmatpush1.xpose.msra.mxu0 0.0
        %1225 = vmatprep.subr.mxu0 0.0
        %1226 = vmatpush1.xpose.msra.mxu0 0.0
        %1227 = vmatprep.mubr.f32.mxu0 0.0
        %1228 = vmatmul.mubr.f32.gmra.mrb[0].mxu0 %v1159
        %v1229 = vpop.f32.mrb[0].mxu0
        %v1230 = vadd.f32 0.0, %v1229
        %v1231 = vpop.f32.mrb[0].mxu0
        %1232 = vdwg.mxu0
        %v1233 = vsel %vm734, %v1230, -inf
        %1234 = vmax.xlane.f32.xlu0 %v1233
        %v1235 = vpop.xlane.xlu0 %1234
        %v1236 = vsub.f32 %v1230, %v1235
        %v1237 = vmul.f32 %v1236, 1.442695
        %v1238 = vpow.pop %v1237
        %v1239 = vsel %vm734, %v1238, 0.0
        %1240 = vadd.xlane.f32.xlu0 %v1239
        %v1241 = vpop.xlane.xlu0 %1240
        %v1242 = vrcp.pop %v1241
        %v1243 = vmul.f32 %v1238, %v1242
        %s1244 = scalar_lea.vmem %s421, 24 [#allocation9]
        %1245 = vst.msk [vmem:[%s1244] sm:$0xff] %vm734, %v1243
        %1246 = vrot.lane.b32.xlu0 %v654, 80
        %v1247 = vpop.permute.xlu0 %1246
        %v1250 = vsel %vm734, %v1243, 0
        %1252 = vmatprep.subr.mxu0 0.0
        %1253 = vmatpush1.msra.mxu0 %v1247
        %1254 = vmatprep.subr.mxu0 0.0
        %1255 = vmatpush1.msra.mxu0 0.0
        %1256 = vmatprep.subr.mxu0 0.0
        %1257 = vmatpush1.msra.mxu0 0.0
        %1258 = vmatprep.subr.mxu0 0.0
        %1259 = vmatpush1.msra.mxu0 0.0
        %1260 = vmatprep.subr.mxu0 0.0
        %1261 = vmatpush1.msra.mxu0 0.0
        %1262 = vmatprep.subr.mxu0 0.0
        %1263 = vmatpush1.msra.mxu0 0.0
        %1264 = vmatprep.subr.mxu0 0.0
        %1265 = vmatpush1.msra.mxu0 0.0
        %1266 = vmatprep.subr.mxu0 0.0
        %1267 = vmatpush1.msra.mxu0 0.0
        %1268 = vmatprep.subr.mxu0 0.0
        %1269 = vmatpush1.msra.mxu0 0.0
        %1270 = vmatprep.subr.mxu0 0.0
        %1271 = vmatpush1.msra.mxu0 0.0
        %1272 = vmatprep.subr.mxu0 0.0
        %1273 = vmatpush1.msra.mxu0 0.0
        %1274 = vmatprep.subr.mxu0 0.0
        %1275 = vmatpush1.msra.mxu0 0.0
        %1276 = vmatprep.subr.mxu0 0.0
        %1277 = vmatpush1.msra.mxu0 0.0
        %1278 = vmatprep.subr.mxu0 0.0
        %1279 = vmatpush1.msra.mxu0 0.0
        %1280 = vmatprep.subr.mxu0 0.0
        %1281 = vmatpush1.msra.mxu0 0.0
        %1282 = vmatprep.subr.mxu0 0.0
        %1283 = vmatpush1.msra.mxu0 0.0
        %1284 = vmatprep.subr.mxu0 0.0
        %1285 = vmatpush1.msra.mxu0 0.0
        %1286 = vmatprep.subr.mxu0 0.0
        %1287 = vmatpush1.msra.mxu0 0.0
        %1288 = vmatprep.subr.mxu0 0.0
        %1289 = vmatpush1.msra.mxu0 0.0
        %1290 = vmatprep.subr.mxu0 0.0
        %1291 = vmatpush1.msra.mxu0 0.0
        %1292 = vmatprep.subr.mxu0 0.0
        %1293 = vmatpush1.msra.mxu0 0.0
        %1294 = vmatprep.subr.mxu0 0.0
        %1295 = vmatpush1.msra.mxu0 0.0
        %1296 = vmatprep.subr.mxu0 0.0
        %1297 = vmatpush1.msra.mxu0 0.0
        %1298 = vmatprep.subr.mxu0 0.0
        %1299 = vmatpush1.msra.mxu0 0.0
        %1300 = vmatprep.subr.mxu0 0.0
        %1301 = vmatpush1.msra.mxu0 0.0
        %1302 = vmatprep.subr.mxu0 0.0
        %1303 = vmatpush1.msra.mxu0 0.0
        %1304 = vmatprep.subr.mxu0 0.0
        %1305 = vmatpush1.msra.mxu0 0.0
        %1306 = vmatprep.subr.mxu0 0.0
        %1307 = vmatpush1.msra.mxu0 0.0
        %1308 = vmatprep.subr.mxu0 0.0
        %1309 = vmatpush1.msra.mxu0 0.0
        %1310 = vmatprep.subr.mxu0 0.0
        %1311 = vmatpush1.msra.mxu0 0.0
        %1312 = vmatprep.subr.mxu0 0.0
        %1313 = vmatpush1.msra.mxu0 0.0
        %1314 = vmatprep.subr.mxu0 0.0
        %1315 = vmatpush1.msra.mxu0 0.0
        %1316 = vmatprep.mubr.f32.mxu0 0.0
        %1317 = vmatmul.mubr.f32.gmra.mrb[0].mxu0 %v1250
        %v1318 = vpop.f32.mrb[0].mxu0
        %v1319 = vadd.f32 0.0, %v1318
        %v1320 = vpop.f32.mrb[0].mxu0
        %1321 = vdwg.mxu0
        %1323 = vrot.lane.b32.xlu0 %v985, 16
        %v1324 = vpop.permute.xlu0 %1323
        %1327 = vrot.lane.b32.xlu0 %v1152, 32
        %v1328 = vpop.permute.xlu0 %1327
        %1331 = vrot.lane.b32.xlu0 %v1319, 48
        %v1332 = vpop.permute.xlu0 %1331
        %v1334 = vsel %vm657, %v817, %v1324
        %v1335 = vsel %vm429, %v1334, %v1328
        %vm1336 = vcmask 392192
        %v1337 = vsel %vm1336, %v1335, %v1332
        %v1338 = vld [vmem:[%s6] sm:$0xff]
        %v1339 = vld [vmem:[%s6 + $0x8] sm:$0xff]
        %v1340 = vld [vmem:[%s6 + $0x10] sm:$0xff]
        %v1341 = vld [vmem:[%s6 + $0x18] sm:$0xff]
        %v1342 = vld [vmem:[%s6 + $0x20] sm:$0xff]
        %v1343 = vld [vmem:[%s6 + $0x28] sm:$0xff]
        %v1344 = vld [vmem:[%s6 + $0x30] sm:$0xff]
        %v1345 = vld [vmem:[%s6 + $0x38] sm:$0xff]
        %vm1346 = vcmask 523264
        %v1348 = vsel %vm1346, %v1337, 0
        %1350 = vmatprep.subr.mxu0 0.0
        %1351 = vmatpush1.msra.mxu0 %v1338
        %1352 = vmatprep.subr.mxu0 0.0
        %1353 = vmatpush1.msra.mxu0 %v1339
        %1354 = vmatprep.subr.mxu0 0.0
        %1355 = vmatpush1.msra.mxu0 %v1340
        %1356 = vmatprep.subr.mxu0 0.0
        %1357 = vmatpush1.msra.mxu0 %v1341
        %1358 = vmatprep.subr.mxu0 0.0
        %1359 = vmatpush1.msra.mxu0 %v1342
        %1360 = vmatprep.subr.mxu0 0.0
        %1361 = vmatpush1.msra.mxu0 %v1343
        %1362 = vmatprep.subr.mxu0 0.0
        %1363 = vmatpush1.msra.mxu0 %v1344
        %1364 = vmatprep.subr.mxu0 0.0
        %1365 = vmatpush1.msra.mxu0 %v1345
        %1366 = vmatprep.subr.mxu0 0.0
        %1367 = vmatpush1.msra.mxu0 0.0
        %1368 = vmatprep.subr.mxu0 0.0
        %1369 = vmatpush1.msra.mxu0 0.0
        %1370 = vmatprep.subr.mxu0 0.0
        %1371 = vmatpush1.msra.mxu0 0.0
        %1372 = vmatprep.subr.mxu0 0.0
        %1373 = vmatpush1.msra.mxu0 0.0
        %1374 = vmatprep.subr.mxu0 0.0
        %1375 = vmatpush1.msra.mxu0 0.0
        %1376 = vmatprep.subr.mxu0 0.0
        %1377 = vmatpush1.msra.mxu0 0.0
        %1378 = vmatprep.subr.mxu0 0.0
        %1379 = vmatpush1.msra.mxu0 0.0
        %1380 = vmatprep.subr.mxu0 0.0
        %1381 = vmatpush1.msra.mxu0 0.0
        %1382 = vmatprep.subr.mxu0 0.0
        %1383 = vmatpush1.msra.mxu0 0.0
        %1384 = vmatprep.subr.mxu0 0.0
        %1385 = vmatpush1.msra.mxu0 0.0
        %1386 = vmatprep.subr.mxu0 0.0
        %1387 = vmatpush1.msra.mxu0 0.0
        %1388 = vmatprep.subr.mxu0 0.0
        %1389 = vmatpush1.msra.mxu0 0.0
        %1390 = vmatprep.subr.mxu0 0.0
        %1391 = vmatpush1.msra.mxu0 0.0
        %1392 = vmatprep.subr.mxu0 0.0
        %1393 = vmatpush1.msra.mxu0 0.0
        %1394 = vmatprep.subr.mxu0 0.0
        %1395 = vmatpush1.msra.mxu0 0.0
        %1396 = vmatprep.subr.mxu0 0.0
        %1397 = vmatpush1.msra.mxu0 0.0
        %1398 = vmatprep.subr.mxu0 0.0
        %1399 = vmatpush1.msra.mxu0 0.0
        %1400 = vmatprep.subr.mxu0 0.0
        %1401 = vmatpush1.msra.mxu0 0.0
        %1402 = vmatprep.subr.mxu0 0.0
        %1403 = vmatpush1.msra.mxu0 0.0
        %1404 = vmatprep.subr.mxu0 0.0
        %1405 = vmatpush1.msra.mxu0 0.0
        %1406 = vmatprep.subr.mxu0 0.0
        %1407 = vmatpush1.msra.mxu0 0.0
        %1408 = vmatprep.subr.mxu0 0.0
        %1409 = vmatpush1.msra.mxu0 0.0
        %1410 = vmatprep.subr.mxu0 0.0
        %1411 = vmatpush1.msra.mxu0 0.0
        %1412 = vmatprep.subr.mxu0 0.0
        %1413 = vmatpush1.msra.mxu0 0.0
        %1414 = vmatprep.mubr.f32.mxu0 0.0
        %1415 = vmatmul.mubr.f32.gmra.mrb[0].mxu0 %v1348
        %v1416 = vpop.f32.mrb[0].mxu0
        %v1417 = vadd.f32 0.0, %v1416
        %v1418 = vpop.f32.mrb[0].mxu0
        %1419 = vdwg.mxu0
        %1420 = vst.msk [vmem:[%s414] sm:$0xff] %vm429, %v1417
        %s1421 = sand.u32 %s218, 1
        %s1422 = scalar_lea.sflag [#allocation4], %s1421
        %s1423 = sand.u32 %s218, 1
        %s1424 = smul.addr %s1423, 8
        %s1425 = scalar_lea.vmem [#allocation8], %s1424
        %s1426 = sand.u32 %s246, 1
        %s1427 = scalar_lea.sflag [#allocation10], %s1426
        %s1428 = sand.u32 %s246, 1
        %s1429 = smul.addr %s1428, 32
        %s1430 = scalar_lea.vmem [#allocation9], %s1429
        // Predicated region
        $region61: #{tpu_custom_call.1} parent=47 // pred_check
          %p1431 = pneg %p228
        $region62: #{tpu_custom_call.1} parent=47 // pred_check_branch
          %1433 = sbr.rel (%p1431) target = $region64
        $region63: #{tpu_custom_call.1} parent=47 // pred_region
          %s1435 = ssub.s32 128, 128
          %1436 = vsyncadd %s1422, %s1435
          %s1437 = sadd.s32 %s37, %s36
          %s1438 = smul.addr %s1437, 128
          %s1439 = scalar_lea.hbm %s7, %s1438
          %s1441 = sshll.u32 %s1425, 4
          %s1442 = int_to_ptr.vmem [resolvable:$true] %s1441
          %1444 = dma.vmem_to_hbm [thread:$0]  %s1442, 128, %s1439, %s1422
        $region64: #{tpu_custom_call.1} parent=47 // pred_fallthru
          _
        // Predicated region
        $region65: #{tpu_custom_call.1} parent=47 // pred_check
          %p1445 = pneg %p256
        $region66: #{tpu_custom_call.1} parent=47 // pred_check_branch
          %1447 = sbr.rel (%p1445) target = $region68
        $region67: #{tpu_custom_call.1} parent=47 // pred_region
          %s1449 = ssub.s32 512, 512
          %1450 = vsyncadd %s1427, %s1449
          %s1451 = smul.addr %s36, 4
          %s1452 = sadd.s32 %s37, %s1451
          %s1453 = smul.addr %s1452, 128
          %s1454 = scalar_lea.hbm %s8, %s1453
          %s1455 = sshll.u32 %s1430, 4
          %s1456 = int_to_ptr.vmem [resolvable:$true] %s1455
          %1461 = dma.vmem_to_hbm [thread:$0]  %s1456, 512, %s1454, %s1427, 128, 128, 8
        $region68: #{tpu_custom_call.1} parent=47 // pred_fallthru
          _
      $region48: #{tpu_custom_call.1} parent=5 // pred_fallthru
        _
      %p1462 = scmp.le.s32.totalorder 2, %s27
      // Predicated region
      $region69: #{tpu_custom_call.1} parent=5 // pred_check
        %p1463 = pneg %p1462
      $region70: #{tpu_custom_call.1} parent=5 // pred_check_branch
        %1465 = sbr.rel (%p1463) target = $region72
      $region71: #{tpu_custom_call.1} parent=5 // pred_region
        %s1466 = ssub.s32 %s27, 2
        // Predicated region
        $region73: #{tpu_custom_call.1} parent=71 // pred_check
          %p1467 = pneg %p234
        $region74: #{tpu_custom_call.1} parent=71 // pred_check_branch
          %1469 = sbr.rel (%p1467) target = $region76
        $region75: #{tpu_custom_call.1} parent=71 // pred_region
          %s1470 = sand.u32 %s219, 1
          %s1471 = scalar_lea.sflag [#allocation4], %s1470
          %s1472 = sand.u32 %s219, 1
          %s1473 = smul.addr %s1472, 8
          %s1474 = scalar_lea.vmem [#allocation8], %s1473
          %1475 = dma.done %s1471, 128
        $region76: #{tpu_custom_call.1} parent=71 // pred_fallthru
          _
        // Predicated region
        $region77: #{tpu_custom_call.1} parent=71 // pred_check
          %p1476 = pneg %p262
        $region78: #{tpu_custom_call.1} parent=71 // pred_check_branch
          %1478 = sbr.rel (%p1476) target = $region80
        $region79: #{tpu_custom_call.1} parent=71 // pred_region
          %s1479 = sand.u32 %s247, 1
          %s1480 = scalar_lea.sflag [#allocation10], %s1479
          %s1481 = sand.u32 %s247, 1
          %s1482 = smul.addr %s1481, 32
          %s1483 = scalar_lea.vmem [#allocation9], %s1482
          %1484 = dma.done %s1480, 512
        $region80: #{tpu_custom_call.1} parent=71 // pred_fallthru
          _
      $region72: #{tpu_custom_call.1} parent=5 // pred_fallthru
        _
    $region6: #{tpu_custom_call.1} parent=1 // loop_footer
      %s31 = sadd.s32 1, %s27
    $region7: #{tpu_custom_call.1} parent=1 // loop_footer_branch
      %26 = sbr.rel target = $region3
    $region8: #{tpu_custom_call.1} parent=1 // loop_exit
      _
    %1485 = vsyncpa [#allocation3], 1
    %s1486 = scalar_lea.sflag [#allocation3], 1
    %1487 = vsyncpa %s1486, 1
    %1488 = vsyncpa [#allocation6], 1
    %s1489 = scalar_lea.sflag [#allocation6], 1
    %1490 = vsyncpa %s1489, 1
    %1491 = vsyncpa [#allocation4], 1
    %s1492 = scalar_lea.sflag [#allocation4], 1
    %1493 = vsyncpa %s1492, 1
    %1494 = vsyncpa [#allocation10], 1
    %s1495 = scalar_lea.sflag [#allocation10], 1
    %1496 = vsyncpa %s1495, 1

</llo_original>
